<compile_context>
chip_gen: v7x
topology: tpu7x:2x2x1
jax: 0.10.0
libtpu: 0.0.40
codegen_flags: <defaults>
</compile_context>

<pallas_src>
import numpy as np
import jax
import jax.numpy as jnp
from jax import lax
from jax.experimental import pallas as pl
from jax.experimental.pallas import tpu as pltpu


def cnn_forward(x, params):
    """Whole-network forward pass in a single fused Pallas kernel (batch = parallel grid)."""
    (cw1, cb1), (cw2, cb2), (fw1, fb1), (fw2, fb2) = params
    N, Cin, H, W = x.shape
    C1 = cw1.shape[0]
    C2 = cw2.shape[0]
    KH, KW = cw1.shape[2], cw1.shape[3]
    assert (KH, KW) == (3, 3)            # conv_params = {'kernel_size': 3, 'padding': 1}

    # ------------------------- static geometry (flattened, padded) -----------
    Hp1, Wp1 = H + 2, W + 2              # conv1 zero-padded input
    A1 = Hp1 * Wp1
    Ho1, Wo1 = H, W                      # conv1 output ("same" conv)
    L1 = (Ho1 - 1) * Wp1 + Wo1           # flat conv1 accumulator length
    H2, W2 = Ho1 // 2, Wo1 // 2          # pool1 output
    Hp2, Wp2 = H2 + 2, W2 + 2            # conv2 zero-padded input
    A2 = Hp2 * Wp2
    Ho2, Wo2 = H2, W2                    # conv2 output
    L2 = (Ho2 - 1) * Wp2 + Wo2
    H3, W3 = Ho2 // 2, Wo2 // 2          # pool2 output
    P3 = H3 * W3
    FEAT = C2 * P3
    HID = fw1.shape[0]
    OUT = fw2.shape[0]
    R1 = KH * KW * Cin                   # fused conv1 contraction dim
    R2 = KH * KW * C1                    # fused conv2 contraction dim
    L1m = L1 - Wp1 - 1                   # valid window-max (pool top-left) range
    L2m = L2 - Wp2 - 1
    assert fw1.shape[1] == FEAT
    # Geometry guards (reviewer note): the flat-layout window max must only read
    # valid (non-wrap-around) conv-output columns at *selected* pool positions.
    assert Ho1 % 2 == 0 and Wo1 % 2 == 0 and Ho2 % 2 == 0 and Wo2 % 2 == 0
    assert (H2 - 1) * 2 * Wp1 + (W2 - 1) * 2 + Wp1 + 1 < L1
    assert (H3 - 1) * 2 * Wp2 + (W3 - 1) * 2 + Wp2 + 1 < L2

    # ---------------- constant 0/1 selection matrices (trace-time, tiny) ------
    # S1[p, t] = 1: pick flat conv1 column p (pool-window top-left, already
    # window-maxed) and scatter into zero-padded flat conv2-input position t.
    # Its padding columns are all-zero, so conv2's zero padding is re-created.
    S1 = np.zeros((L1m, A2), np.float32)
    for hh in range(H2):
        for ww in range(W2):
            S1[(2 * hh) * Wp1 + 2 * ww, (hh + 1) * Wp2 + (ww + 1)] = 1.0
    # T2[p, c*P3 + q] = 1 for EVERY channel c: selects pool top-left p of the
    # flat conv2 output and replicates it into every channel block of the flat
    # NCHW feature row; the block-diagonal mask MSK then keeps channel c only.
    T2 = np.zeros((L2m, FEAT), np.float32)
    for hh in range(H3):
        for ww in range(W3):
            for c in range(C2):
                T2[(2 * hh) * Wp2 + 2 * ww, c * P3 + hh * W3 + ww] = 1.0
    MSK = np.zeros((C2, FEAT), np.float32)
    for c in range(C2):
        MSK[c, c * P3:(c + 1) * P3] = 1.0

    # ---------------- host-side layout prep (pad + static weight re-layout) ---
    bf16 = jnp.bfloat16
    xpf = jnp.pad(x, ((0, 0), (0, 0), (1, 1), (1, 1))).reshape(N, Cin, A1).astype(bf16)
    w1f = jnp.transpose(cw1, (0, 2, 3, 1)).reshape(C1, R1).astype(bf16)   # [co, tap*Cin+ci]
    w2f = jnp.transpose(cw2, (0, 2, 3, 1)).reshape(C2, R2).astype(bf16)
    fw1p = fw1.T.astype(bf16)            # (FEAT, HID), NCHW feature order
    fw2t = fw2.T.astype(bf16)            # (HID, OUT)
    b1r = cb1.reshape(C1, 1).astype(jnp.float32)
    b2r = cb2.reshape(C2, 1).astype(jnp.float32)
    fb1r = fb1.reshape(1, HID).astype(jnp.float32)
    fb2r = fb2.reshape(1, OUT).astype(jnp.float32)
    s1 = jnp.asarray(S1, bf16)
    t2 = jnp.asarray(T2, bf16)
    msk = jnp.asarray(MSK, jnp.float32)

    tap_off1 = [kh * Wp1 + kw for kh in range(KH) for kw in range(KW)]
    tap_off2 = [kh * Wp2 + kw for kh in range(KH) for kw in range(KW)]

    def kernel(xpf_ref, w1f_ref, b1_ref, w2f_ref, b2_ref, s1_ref, t2_ref, msk_ref,
               fw1p_ref, fb1_ref, fw2t_ref, fb2_ref, o_ref, xcat1_s, xcat2_s):
        xf = xpf_ref[0]                                     # (Cin, A1) bf16, this image

        # ---- conv1: stack 9 shifted taps along sublanes, ONE MXU matmul ------
        for kidx, off in enumerate(tap_off1):
            xcat1_s[kidx * Cin:(kidx + 1) * Cin, :] = xf[:, off:off + L1]
        acc1 = jnp.dot(w1f_ref[...], xcat1_s[...],
                       preferred_element_type=jnp.float32) + b1_ref[...]    # (C1, L1)

        # ---- 2x2 max-pool: VPU window-max, ONE selection matmul, ReLU --------
        # (ReLU commutes with max and with the one-hot selection; padding
        #  columns of S1 are all-zero so they stay exactly 0 after ReLU.)
        m1 = jnp.maximum(jnp.maximum(acc1[:, 0:L1m], acc1[:, 1:1 + L1m]),
                         jnp.maximum(acc1[:, Wp1:Wp1 + L1m], acc1[:, Wp1 + 1:Wp1 + 1 + L1m]))
        xf2 = jnp.maximum(
            jnp.dot(m1.astype(jnp.bfloat16), s1_ref[...],
                    preferred_element_type=jnp.float32), 0.0)               # (C1, A2)
        xf2 = xf2.astype(jnp.bfloat16)

        # ---- conv2: same tap-fused single matmul ------------------------------
        for kidx, off in enumerate(tap_off2):
            xcat2_s[kidx * C1:(kidx + 1) * C1, :] = xf2[:, off:off + L2]
        acc2 = jnp.dot(w2f_ref[...], xcat2_s[...],
                       preferred_element_type=jnp.float32) + b2_ref[...]    # (C2, L2)

        # ---- pool2 + NCHW flatten: window-max, channel-replicated selection
        #      matmul, block-diagonal mask + sublane sum, ReLU -> (1, FEAT) ----
        m2 = jnp.maximum(jnp.maximum(acc2[:, 0:L2m], acc2[:, 1:1 + L2m]),
                         jnp.maximum(acc2[:, Wp2:Wp2 + L2m], acc2[:, Wp2 + 1:Wp2 + 1 + L2m]))
        r = jnp.dot(m2.astype(jnp.bfloat16), t2_ref[...],
                    preferred_element_type=jnp.float32)                     # (C2, FEAT)
        feat = jnp.maximum(jnp.sum(r * msk_ref[...], axis=0, keepdims=True), 0.0)

        # ---- FC1 + ReLU + FC2 (single K=FEAT contraction) ---------------------
        h = jnp.maximum(
            jnp.dot(feat.astype(jnp.bfloat16), fw1p_ref[...],
                    preferred_element_type=jnp.float32) + fb1_ref[...], 0.0)
        logits = jnp.dot(h.astype(jnp.bfloat16), fw2t_ref[...],
                         preferred_element_type=jnp.float32) + fb2_ref[...]
        o_ref[0] = logits.astype(o_ref.dtype)

    def const_spec(shape):
        zeros = (0,) * len(shape)
        return pl.BlockSpec(shape, lambda n: zeros)   # resident constant, no re-DMA

    out3 = pl.pallas_call(
        kernel,
        out_shape=jax.ShapeDtypeStruct((N, 1, OUT), jnp.float32),
        grid=(N,),
        in_specs=[
            pl.BlockSpec((1, Cin, A1), lambda n: (n, 0, 0)),
            const_spec((C1, R1)), const_spec((C1, 1)),
            const_spec((C2, R2)), const_spec((C2, 1)),
            const_spec((L1m, A2)), const_spec((L2m, FEAT)), const_spec((C2, FEAT)),
            const_spec((FEAT, HID)), const_spec((1, HID)),
            const_spec((HID, OUT)), const_spec((1, OUT)),
        ],
        out_specs=pl.BlockSpec((1, 1, OUT), lambda n: (n, 0, 0)),
        scratch_shapes=[pltpu.VMEM((R1, L1), jnp.bfloat16),
                        pltpu.VMEM((R2, L2), jnp.bfloat16)],
        compiler_params=pltpu.CompilerParams(dimension_semantics=("parallel",)),
    )(xpf, w1f, b1r, w2f, b2r, s1, t2, msk, fw1p, fb1r, fw2t, fb2r)
    return out3.reshape(N, OUT)


# Pure-JAX reference (numerical sanity check only).
def reference_forward(x, params):
    (cw1, cb1), (cw2, cb2), (fw1, fb1), (fw2, fb2) = params

    def conv(x, w, b):
        y = lax.conv_general_dilated(
            x, w, window_strides=(1, 1), padding=((1, 1), (1, 1)),
            dimension_numbers=("NCHW", "OIHW", "NCHW"),
            precision=lax.Precision.HIGHEST)
        return jnp.maximum(y + b[None, :, None, None], 0.0)

    def pool(x):
        return lax.reduce_window(x, -jnp.inf, lax.max,
                                 (1, 1, 2, 2), (1, 1, 2, 2), "VALID")

    y = pool(conv(x, cw1, cb1))
    y = pool(conv(y, cw2, cb2))
    f = y.reshape(y.shape[0], -1)
    h = jnp.maximum(f @ fw1.T + fb1, 0.0)
    return h @ fw2.T + fb2


if __name__ == "__main__":
    # Config: in_size=(4,16,16), channels=[8,8], pool_every=1, hidden_dims=[32],
    #         out_classes=10, conv 3x3 pad=1, max-pool 2x2, relu.
    N, Cin, H, W = 2, 4, 16, 16
    C1, C2 = 8, 8
    HID, OUT = 32, 10
    FEAT = C2 * (H // 4) * (W // 4)            # 8 * 4 * 4 = 128

    key = jax.random.PRNGKey(0)
    ks = jax.random.split(key, 9)
    params = (
        (0.1 * jax.random.normal(ks[0], (C1, Cin, 3, 3), jnp.float32),
         0.1 * jax.random.normal(ks[1], (C1,), jnp.float32)),
        (0.1 * jax.random.normal(ks[2], (C2, C1, 3, 3), jnp.float32),
         0.1 * jax.random.normal(ks[3], (C2,), jnp.float32)),
        (0.1 * jax.random.normal(ks[4], (HID, FEAT), jnp.float32),
         0.1 * jax.random.normal(ks[5], (HID,), jnp.float32)),
        (0.1 * jax.random.normal(ks[6], (OUT, HID), jnp.float32),
         0.1 * jax.random.normal(ks[7], (OUT,), jnp.float32)),
    )
    x = jax.random.normal(ks[8], (N, Cin, H, W), jnp.float32)

    out = jax.jit(cnn_forward)(x, params)
    out = jax.block_until_ready(out)

    ref = reference_forward(x, params)
    assert out.shape == (N, OUT), out.shape
    assert jnp.allclose(out, ref, rtol=2e-2, atol=2e-2), (out, ref)

    print("KERNEL_OK")
</pallas_src>

<mosaic_0001>
module attributes {stable_mosaic.version = 11 : i64} {
  func.func @kernel(%arg0: i32, %arg1: memref<1x4x324xbf16, #tpu.memory_space<vmem>>, %arg2: memref<8x36xbf16, #tpu.memory_space<vmem>>, %arg3: memref<8x1xf32, #tpu.memory_space<vmem>>, %arg4: memref<8x72xbf16, #tpu.memory_space<vmem>>, %arg5: memref<8x1xf32, #tpu.memory_space<vmem>>, %arg6: memref<267x100xbf16, #tpu.memory_space<vmem>>, %arg7: memref<67x128xbf16, #tpu.memory_space<vmem>>, %arg8: memref<8x128xf32, #tpu.memory_space<vmem>>, %arg9: memref<128x32xbf16, #tpu.memory_space<vmem>>, %arg10: memref<1x32xf32, #tpu.memory_space<vmem>>, %arg11: memref<32x10xbf16, #tpu.memory_space<vmem>>, %arg12: memref<1x10xf32, #tpu.memory_space<vmem>>, %arg13: memref<1x1x10xf32, #tpu.memory_space<vmem>>, %arg14: memref<36x286xbf16, #tpu.memory_space<vmem>>, %arg15: memref<72x78xbf16, #tpu.memory_space<vmem>>) attributes {dimension_semantics = [#tpu.dimension_semantics<parallel>], iteration_bounds = array<i64: 2>, scalar_prefetch = 0 : i64, scratch_operands = 2 : i64, tpu.core_type = #tpu.core_type<tc>, window_params = [{transform_indices = @transform_0, window_bounds = array<i64: 1, 4, 324>}, {pipeline_mode = #tpu.pipeline_mode<synchronous>, transform_indices = @transform_1, window_bounds = array<i64: 8, 36>}, {pipeline_mode = #tpu.pipeline_mode<synchronous>, transform_indices = @transform_2, window_bounds = array<i64: 8, 1>}, {pipeline_mode = #tpu.pipeline_mode<synchronous>, transform_indices = @transform_3, window_bounds = array<i64: 8, 72>}, {pipeline_mode = #tpu.pipeline_mode<synchronous>, transform_indices = @transform_4, window_bounds = array<i64: 8, 1>}, {pipeline_mode = #tpu.pipeline_mode<synchronous>, transform_indices = @transform_5, window_bounds = array<i64: 267, 100>}, {pipeline_mode = #tpu.pipeline_mode<synchronous>, transform_indices = @transform_6, window_bounds = array<i64: 67, 128>}, {pipeline_mode = #tpu.pipeline_mode<synchronous>, transform_indices = @transform_7, window_bounds = array<i64: 8, 128>}, {pipeline_mode = #tpu.pipeline_mode<synchronous>, transform_indices = @transform_8, window_bounds = array<i64: 128, 32>}, {pipeline_mode = #tpu.pipeline_mode<synchronous>, transform_indices = @transform_9, window_bounds = array<i64: 1, 32>}, {pipeline_mode = #tpu.pipeline_mode<synchronous>, transform_indices = @transform_10, window_bounds = array<i64: 32, 10>}, {pipeline_mode = #tpu.pipeline_mode<synchronous>, transform_indices = @transform_11, window_bounds = array<i64: 1, 10>}, {transform_indices = @transform_12, window_bounds = array<i64: 1, 1, 10>}]} {
    %c0 = arith.constant 0 : index
    %c0_0 = arith.constant 0 : index
    %c0_1 = arith.constant 0 : index
    %0 = vector.load %arg1[%c0, %c0_0, %c0_1] : memref<1x4x324xbf16, #tpu.memory_space<vmem>>, vector<1x4x324xbf16>
    %1 = vector.shape_cast %0 : vector<1x4x324xbf16> to vector<4x324xbf16>
    %2 = vector.extract_strided_slice %1 {offsets = [0, 0], sizes = [4, 286], strides = [1, 1]} : vector<4x324xbf16> to vector<4x286xbf16>
    %c0_2 = arith.constant 0 : index
    %c0_3 = arith.constant 0 : index
    %3 = vector.load %arg14[%c0_2, %c0_3] : memref<36x286xbf16, #tpu.memory_space<vmem>>, vector<4x286xbf16>
    tpu.vector_store %arg14[%c0_2, %c0_3], %2 {strides = array<i32>} : memref<36x286xbf16, #tpu.memory_space<vmem>>, vector<4x286xbf16>,
    %4 = vector.extract_strided_slice %1 {offsets = [0, 1], sizes = [4, 286], strides = [1, 1]} : vector<4x324xbf16> to vector<4x286xbf16>
    %c4 = arith.constant 4 : index
    %c0_4 = arith.constant 0 : index
    %5 = vector.load %arg14[%c4, %c0_4] : memref<36x286xbf16, #tpu.memory_space<vmem>>, vector<4x286xbf16>
    tpu.vector_store %arg14[%c4, %c0_4], %4 {strides = array<i32>} : memref<36x286xbf16, #tpu.memory_space<vmem>>, vector<4x286xbf16>,
    %6 = vector.extract_strided_slice %1 {offsets = [0, 2], sizes = [4, 286], strides = [1, 1]} : vector<4x324xbf16> to vector<4x286xbf16>
    %c8 = arith.constant 8 : index
    %c0_5 = arith.constant 0 : index
    %7 = vector.load %arg14[%c8, %c0_5] : memref<36x286xbf16, #tpu.memory_space<vmem>>, vector<4x286xbf16>
    tpu.vector_store %arg14[%c8, %c0_5], %6 {strides = array<i32>} : memref<36x286xbf16, #tpu.memory_space<vmem>>, vector<4x286xbf16>,
    %8 = vector.extract_strided_slice %1 {offsets = [0, 18], sizes = [4, 286], strides = [1, 1]} : vector<4x324xbf16> to vector<4x286xbf16>
    %c12 = arith.constant 12 : index
    %c0_6 = arith.constant 0 : index
    %9 = vector.load %arg14[%c12, %c0_6] : memref<36x286xbf16, #tpu.memory_space<vmem>>, vector<4x286xbf16>
    tpu.vector_store %arg14[%c12, %c0_6], %8 {strides = array<i32>} : memref<36x286xbf16, #tpu.memory_space<vmem>>, vector<4x286xbf16>,
    %10 = vector.extract_strided_slice %1 {offsets = [0, 19], sizes = [4, 286], strides = [1, 1]} : vector<4x324xbf16> to vector<4x286xbf16>
    %c16 = arith.constant 16 : index
    %c0_7 = arith.constant 0 : index
    %11 = vector.load %arg14[%c16, %c0_7] : memref<36x286xbf16, #tpu.memory_space<vmem>>, vector<4x286xbf16>
    tpu.vector_store %arg14[%c16, %c0_7], %10 {strides = array<i32>} : memref<36x286xbf16, #tpu.memory_space<vmem>>, vector<4x286xbf16>,
    %12 = vector.extract_strided_slice %1 {offsets = [0, 20], sizes = [4, 286], strides = [1, 1]} : vector<4x324xbf16> to vector<4x286xbf16>
    %c20 = arith.constant 20 : index
    %c0_8 = arith.constant 0 : index
    %13 = vector.load %arg14[%c20, %c0_8] : memref<36x286xbf16, #tpu.memory_space<vmem>>, vector<4x286xbf16>
    tpu.vector_store %arg14[%c20, %c0_8], %12 {strides = array<i32>} : memref<36x286xbf16, #tpu.memory_space<vmem>>, vector<4x286xbf16>,
    %14 = vector.extract_strided_slice %1 {offsets = [0, 36], sizes = [4, 286], strides = [1, 1]} : vector<4x324xbf16> to vector<4x286xbf16>
    %c24 = arith.constant 24 : index
    %c0_9 = arith.constant 0 : index
    %15 = vector.load %arg14[%c24, %c0_9] : memref<36x286xbf16, #tpu.memory_space<vmem>>, vector<4x286xbf16>
    tpu.vector_store %arg14[%c24, %c0_9], %14 {strides = array<i32>} : memref<36x286xbf16, #tpu.memory_space<vmem>>, vector<4x286xbf16>,
    %16 = vector.extract_strided_slice %1 {offsets = [0, 37], sizes = [4, 286], strides = [1, 1]} : vector<4x324xbf16> to vector<4x286xbf16>
    %c28 = arith.constant 28 : index
    %c0_10 = arith.constant 0 : index
    %17 = vector.load %arg14[%c28, %c0_10] : memref<36x286xbf16, #tpu.memory_space<vmem>>, vector<4x286xbf16>
    tpu.vector_store %arg14[%c28, %c0_10], %16 {strides = array<i32>} : memref<36x286xbf16, #tpu.memory_space<vmem>>, vector<4x286xbf16>,
    %18 = vector.extract_strided_slice %1 {offsets = [0, 38], sizes = [4, 286], strides = [1, 1]} : vector<4x324xbf16> to vector<4x286xbf16>
    %c32 = arith.constant 32 : index
    %c0_11 = arith.constant 0 : index
    %19 = vector.load %arg14[%c32, %c0_11] : memref<36x286xbf16, #tpu.memory_space<vmem>>, vector<4x286xbf16>
    tpu.vector_store %arg14[%c32, %c0_11], %18 {strides = array<i32>} : memref<36x286xbf16, #tpu.memory_space<vmem>>, vector<4x286xbf16>,
    %c0_12 = arith.constant 0 : index
    %c0_13 = arith.constant 0 : index
    %20 = vector.load %arg2[%c0_12, %c0_13] : memref<8x36xbf16, #tpu.memory_space<vmem>>, vector<8x36xbf16>
    %c0_14 = arith.constant 0 : index
    %c0_15 = arith.constant 0 : index
    %21 = vector.load %arg14[%c0_14, %c0_15] : memref<36x286xbf16, #tpu.memory_space<vmem>>, vector<36x286xbf16>
    %cst = arith.constant dense<0.000000e+00> : vector<8x286xf32>
    %22 = tpu.matmul %20, %21, %cst {dimension_numbers = #tpu.dot_dimension_numbers<[1], [0], [0], [1], [0, 0, 1, 1], [], []>} : vector<8x36xbf16>, vector<36x286xbf16>, vector<8x286xf32> -> vector<8x286xf32>
    %c0_16 = arith.constant 0 : index
    %c0_17 = arith.constant 0 : index
    %23 = vector.load %arg3[%c0_16, %c0_17] : memref<8x1xf32, #tpu.memory_space<vmem>>, vector<8x1xf32>
    %24 = vector.broadcast %23 : vector<8x1xf32> to vector<8x286xf32>
    %25 = arith.addf %22, %24 : vector<8x286xf32>
    %26 = vector.extract_strided_slice %25 {offsets = [0, 0], sizes = [8, 267], strides = [1, 1]} : vector<8x286xf32> to vector<8x267xf32>
    %27 = vector.extract_strided_slice %25 {offsets = [0, 1], sizes = [8, 267], strides = [1, 1]} : vector<8x286xf32> to vector<8x267xf32>
    %28 = arith.maximumf %26, %27 : vector<8x267xf32>
    %29 = vector.extract_strided_slice %25 {offsets = [0, 18], sizes = [8, 267], strides = [1, 1]} : vector<8x286xf32> to vector<8x267xf32>
    %30 = vector.extract_strided_slice %25 {offsets = [0, 19], sizes = [8, 267], strides = [1, 1]} : vector<8x286xf32> to vector<8x267xf32>
    %31 = arith.maximumf %29, %30 : vector<8x267xf32>
    %32 = arith.maximumf %28, %31 : vector<8x267xf32>
    %33 = arith.truncf %32 : vector<8x267xf32> to vector<8x267xbf16>
    %c0_18 = arith.constant 0 : index
    %c0_19 = arith.constant 0 : index
    %34 = vector.load %arg6[%c0_18, %c0_19] : memref<267x100xbf16, #tpu.memory_space<vmem>>, vector<267x100xbf16>
    %cst_20 = arith.constant dense<0.000000e+00> : vector<8x100xf32>
    %35 = tpu.matmul %33, %34, %cst_20 {dimension_numbers = #tpu.dot_dimension_numbers<[1], [0], [0], [1], [0, 0, 1, 1], [], []>} : vector<8x267xbf16>, vector<267x100xbf16>, vector<8x100xf32> -> vector<8x100xf32>
    %cst_21 = arith.constant 0.000000e+00 : f32
    %36 = vector.broadcast %cst_21 : f32 to vector<8x100xf32>
    %37 = arith.maximumf %35, %36 : vector<8x100xf32>
    %38 = arith.truncf %37 : vector<8x100xf32> to vector<8x100xbf16>
    %39 = vector.extract_strided_slice %38 {offsets = [0, 0], sizes = [8, 78], strides = [1, 1]} : vector<8x100xbf16> to vector<8x78xbf16>
    %c0_22 = arith.constant 0 : index
    %c0_23 = arith.constant 0 : index
    %40 = vector.load %arg15[%c0_22, %c0_23] : memref<72x78xbf16, #tpu.memory_space<vmem>>, vector<8x78xbf16>
    tpu.vector_store %arg15[%c0_22, %c0_23], %39 {strides = array<i32>} : memref<72x78xbf16, #tpu.memory_space<vmem>>, vector<8x78xbf16>,
    %41 = vector.extract_strided_slice %38 {offsets = [0, 1], sizes = [8, 78], strides = [1, 1]} : vector<8x100xbf16> to vector<8x78xbf16>
    %c8_24 = arith.constant 8 : index
    %c0_25 = arith.constant 0 : index
    %42 = vector.load %arg15[%c8_24, %c0_25] : memref<72x78xbf16, #tpu.memory_space<vmem>>, vector<8x78xbf16>
    tpu.vector_store %arg15[%c8_24, %c0_25], %41 {strides = array<i32>} : memref<72x78xbf16, #tpu.memory_space<vmem>>, vector<8x78xbf16>,
    %43 = vector.extract_strided_slice %38 {offsets = [0, 2], sizes = [8, 78], strides = [1, 1]} : vector<8x100xbf16> to vector<8x78xbf16>
    %c16_26 = arith.constant 16 : index
    %c0_27 = arith.constant 0 : index
    %44 = vector.load %arg15[%c16_26, %c0_27] : memref<72x78xbf16, #tpu.memory_space<vmem>>, vector<8x78xbf16>
    tpu.vector_store %arg15[%c16_26, %c0_27], %43 {strides = array<i32>} : memref<72x78xbf16, #tpu.memory_space<vmem>>, vector<8x78xbf16>,
    %45 = vector.extract_strided_slice %38 {offsets = [0, 10], sizes = [8, 78], strides = [1, 1]} : vector<8x100xbf16> to vector<8x78xbf16>
    %c24_28 = arith.constant 24 : index
    %c0_29 = arith.constant 0 : index
    %46 = vector.load %arg15[%c24_28, %c0_29] : memref<72x78xbf16, #tpu.memory_space<vmem>>, vector<8x78xbf16>
    tpu.vector_store %arg15[%c24_28, %c0_29], %45 {strides = array<i32>} : memref<72x78xbf16, #tpu.memory_space<vmem>>, vector<8x78xbf16>,
    %47 = vector.extract_strided_slice %38 {offsets = [0, 11], sizes = [8, 78], strides = [1, 1]} : vector<8x100xbf16> to vector<8x78xbf16>
    %c32_30 = arith.constant 32 : index
    %c0_31 = arith.constant 0 : index
    %48 = vector.load %arg15[%c32_30, %c0_31] : memref<72x78xbf16, #tpu.memory_space<vmem>>, vector<8x78xbf16>
    tpu.vector_store %arg15[%c32_30, %c0_31], %47 {strides = array<i32>} : memref<72x78xbf16, #tpu.memory_space<vmem>>, vector<8x78xbf16>,
    %49 = vector.extract_strided_slice %38 {offsets = [0, 12], sizes = [8, 78], strides = [1, 1]} : vector<8x100xbf16> to vector<8x78xbf16>
    %c40 = arith.constant 40 : index
    %c0_32 = arith.constant 0 : index
    %50 = vector.load %arg15[%c40, %c0_32] : memref<72x78xbf16, #tpu.memory_space<vmem>>, vector<8x78xbf16>
    tpu.vector_store %arg15[%c40, %c0_32], %49 {strides = array<i32>} : memref<72x78xbf16, #tpu.memory_space<vmem>>, vector<8x78xbf16>,
    %51 = vector.extract_strided_slice %38 {offsets = [0, 20], sizes = [8, 78], strides = [1, 1]} : vector<8x100xbf16> to vector<8x78xbf16>
    %c48 = arith.constant 48 : index
    %c0_33 = arith.constant 0 : index
    %52 = vector.load %arg15[%c48, %c0_33] : memref<72x78xbf16, #tpu.memory_space<vmem>>, vector<8x78xbf16>
    tpu.vector_store %arg15[%c48, %c0_33], %51 {strides = array<i32>} : memref<72x78xbf16, #tpu.memory_space<vmem>>, vector<8x78xbf16>,
    %53 = vector.extract_strided_slice %38 {offsets = [0, 21], sizes = [8, 78], strides = [1, 1]} : vector<8x100xbf16> to vector<8x78xbf16>
    %c56 = arith.constant 56 : index
    %c0_34 = arith.constant 0 : index
    %54 = vector.load %arg15[%c56, %c0_34] : memref<72x78xbf16, #tpu.memory_space<vmem>>, vector<8x78xbf16>
    tpu.vector_store %arg15[%c56, %c0_34], %53 {strides = array<i32>} : memref<72x78xbf16, #tpu.memory_space<vmem>>, vector<8x78xbf16>,
    %55 = vector.extract_strided_slice %38 {offsets = [0, 22], sizes = [8, 78], strides = [1, 1]} : vector<8x100xbf16> to vector<8x78xbf16>
    %c64 = arith.constant 64 : index
    %c0_35 = arith.constant 0 : index
    %56 = vector.load %arg15[%c64, %c0_35] : memref<72x78xbf16, #tpu.memory_space<vmem>>, vector<8x78xbf16>
    tpu.vector_store %arg15[%c64, %c0_35], %55 {strides = array<i32>} : memref<72x78xbf16, #tpu.memory_space<vmem>>, vector<8x78xbf16>,
    %c0_36 = arith.constant 0 : index
    %c0_37 = arith.constant 0 : index
    %57 = vector.load %arg4[%c0_36, %c0_37] : memref<8x72xbf16, #tpu.memory_space<vmem>>, vector<8x72xbf16>
    %c0_38 = arith.constant 0 : index
    %c0_39 = arith.constant 0 : index
    %58 = vector.load %arg15[%c0_38, %c0_39] : memref<72x78xbf16, #tpu.memory_space<vmem>>, vector<72x78xbf16>
    %cst_40 = arith.constant dense<0.000000e+00> : vector<8x78xf32>
    %59 = tpu.matmul %57, %58, %cst_40 {dimension_numbers = #tpu.dot_dimension_numbers<[1], [0], [0], [1], [0, 0, 1, 1], [], []>} : vector<8x72xbf16>, vector<72x78xbf16>, vector<8x78xf32> -> vector<8x78xf32>
    %c0_41 = arith.constant 0 : index
    %c0_42 = arith.constant 0 : index
    %60 = vector.load %arg5[%c0_41, %c0_42] : memref<8x1xf32, #tpu.memory_space<vmem>>, vector<8x1xf32>
    %61 = vector.broadcast %60 : vector<8x1xf32> to vector<8x78xf32>
    %62 = arith.addf %59, %61 : vector<8x78xf32>
    %63 = vector.extract_strided_slice %62 {offsets = [0, 0], sizes = [8, 67], strides = [1, 1]} : vector<8x78xf32> to vector<8x67xf32>
    %64 = vector.extract_strided_slice %62 {offsets = [0, 1], sizes = [8, 67], strides = [1, 1]} : vector<8x78xf32> to vector<8x67xf32>
    %65 = arith.maximumf %63, %64 : vector<8x67xf32>
    %66 = vector.extract_strided_slice %62 {offsets = [0, 10], sizes = [8, 67], strides = [1, 1]} : vector<8x78xf32> to vector<8x67xf32>
    %67 = vector.extract_strided_slice %62 {offsets = [0, 11], sizes = [8, 67], strides = [1, 1]} : vector<8x78xf32> to vector<8x67xf32>
    %68 = arith.maximumf %66, %67 : vector<8x67xf32>
    %69 = arith.maximumf %65, %68 : vector<8x67xf32>
    %70 = arith.truncf %69 : vector<8x67xf32> to vector<8x67xbf16>
    %c0_43 = arith.constant 0 : index
    %c0_44 = arith.constant 0 : index
    %71 = vector.load %arg7[%c0_43, %c0_44] : memref<67x128xbf16, #tpu.memory_space<vmem>>, vector<67x128xbf16>
    %cst_45 = arith.constant dense<0.000000e+00> : vector<8x128xf32>
    %72 = tpu.matmul %70, %71, %cst_45 {dimension_numbers = #tpu.dot_dimension_numbers<[1], [0], [0], [1], [0, 0, 1, 1], [], []>} : vector<8x67xbf16>, vector<67x128xbf16>, vector<8x128xf32> -> vector<8x128xf32>
    %c0_46 = arith.constant 0 : index
    %c0_47 = arith.constant 0 : index
    %73 = vector.load %arg8[%c0_46, %c0_47] : memref<8x128xf32, #tpu.memory_space<vmem>>, vector<8x128xf32>
    %74 = arith.mulf %72, %73 : vector<8x128xf32>
    %cst_48 = arith.constant dense<0.000000e+00> : vector<128xf32>
    %75 = vector.multi_reduction <add>, %74, %cst_48 [0] : vector<8x128xf32> to vector<128xf32>
    %76 = vector.shape_cast %75 : vector<128xf32> to vector<1x128xf32>
    %cst_49 = arith.constant 0.000000e+00 : f32
    %77 = vector.broadcast %cst_49 : f32 to vector<1x128xf32>
    %78 = arith.maximumf %76, %77 : vector<1x128xf32>
    %79 = arith.truncf %78 : vector<1x128xf32> to vector<1x128xbf16>
    %c0_50 = arith.constant 0 : index
    %c0_51 = arith.constant 0 : index
    %80 = vector.load %arg9[%c0_50, %c0_51] : memref<128x32xbf16, #tpu.memory_space<vmem>>, vector<128x32xbf16>
    %cst_52 = arith.constant dense<0.000000e+00> : vector<1x32xf32>
    %81 = tpu.matmul %79, %80, %cst_52 {dimension_numbers = #tpu.dot_dimension_numbers<[1], [0], [0], [1], [0, 0, 1, 1], [], []>} : vector<1x128xbf16>, vector<128x32xbf16>, vector<1x32xf32> -> vector<1x32xf32>
    %c0_53 = arith.constant 0 : index
    %c0_54 = arith.constant 0 : index
    %82 = vector.load %arg10[%c0_53, %c0_54] : memref<1x32xf32, #tpu.memory_space<vmem>>, vector<1x32xf32>
    %83 = arith.addf %81, %82 : vector<1x32xf32>
    %cst_55 = arith.constant 0.000000e+00 : f32
    %84 = vector.broadcast %cst_55 : f32 to vector<1x32xf32>
    %85 = arith.maximumf %83, %84 : vector<1x32xf32>
    %86 = arith.truncf %85 : vector<1x32xf32> to vector<1x32xbf16>
    %c0_56 = arith.constant 0 : index
    %c0_57 = arith.constant 0 : index
    %87 = vector.load %arg11[%c0_56, %c0_57] : memref<32x10xbf16, #tpu.memory_space<vmem>>, vector<32x10xbf16>
    %cst_58 = arith.constant dense<0.000000e+00> : vector<1x10xf32>
    %88 = tpu.matmul %86, %87, %cst_58 {dimension_numbers = #tpu.dot_dimension_numbers<[1], [0], [0], [1], [0, 0, 1, 1], [], []>} : vector<1x32xbf16>, vector<32x10xbf16>, vector<1x10xf32> -> vector<1x10xf32>
    %c0_59 = arith.constant 0 : index
    %c0_60 = arith.constant 0 : index
    %89 = vector.load %arg12[%c0_59, %c0_60] : memref<1x10xf32, #tpu.memory_space<vmem>>, vector<1x10xf32>
    %90 = arith.addf %88, %89 : vector<1x10xf32>
    %c0_61 = arith.constant 0 : index
    %c0_62 = arith.constant 0 : index
    %c0_63 = arith.constant 0 : index
    %91 = vector.load %arg13[%c0_61, %c0_62, %c0_63] : memref<1x1x10xf32, #tpu.memory_space<vmem>>, vector<1x1x10xf32>
    %92 = vector.shape_cast %91 : vector<1x1x10xf32> to vector<1x10xf32>
    %93 = vector.shape_cast %90 : vector<1x10xf32> to vector<1x1x10xf32>
    tpu.vector_store %arg13[%c0_61, %c0_62, %c0_63], %93 {strides = array<i32>} : memref<1x1x10xf32, #tpu.memory_space<vmem>>, vector<1x1x10xf32>,
    return
  }
  func.func @transform_0(%arg0: i32) -> (i32, i32, i32) {
    %c0_i32 = arith.constant 0 : i32
    %c0_i32_0 = arith.constant 0 : i32
    %c0_i32_1 = arith.constant 0 : i32
    return %arg0, %c0_i32, %c0_i32_0 : i32, i32, i32
  }
  func.func @transform_1(%arg0: i32) -> (i32, i32) {
    %c0_i32 = arith.constant 0 : i32
    %c0_i32_0 = arith.constant 0 : i32
    %c0_i32_1 = arith.constant 0 : i32
    return %c0_i32, %c0_i32_0 : i32, i32
  }
  func.func @transform_2(%arg0: i32) -> (i32, i32) {
    %c0_i32 = arith.constant 0 : i32
    %c0_i32_0 = arith.constant 0 : i32
    %c0_i32_1 = arith.constant 0 : i32
    return %c0_i32, %c0_i32_0 : i32, i32
  }
  func.func @transform_3(%arg0: i32) -> (i32, i32) {
    %c0_i32 = arith.constant 0 : i32
    %c0_i32_0 = arith.constant 0 : i32
    %c0_i32_1 = arith.constant 0 : i32
    return %c0_i32, %c0_i32_0 : i32, i32
  }
  func.func @transform_4(%arg0: i32) -> (i32, i32) {
    %c0_i32 = arith.constant 0 : i32
    %c0_i32_0 = arith.constant 0 : i32
    %c0_i32_1 = arith.constant 0 : i32
    return %c0_i32, %c0_i32_0 : i32, i32
  }
  func.func @transform_5(%arg0: i32) -> (i32, i32) {
    %c0_i32 = arith.constant 0 : i32
    %c0_i32_0 = arith.constant 0 : i32
    %c0_i32_1 = arith.constant 0 : i32
    return %c0_i32, %c0_i32_0 : i32, i32
  }
  func.func @transform_6(%arg0: i32) -> (i32, i32) {
    %c0_i32 = arith.constant 0 : i32
    %c0_i32_0 = arith.constant 0 : i32
    %c0_i32_1 = arith.constant 0 : i32
    return %c0_i32, %c0_i32_0 : i32, i32
  }
  func.func @transform_7(%arg0: i32) -> (i32, i32) {
    %c0_i32 = arith.constant 0 : i32
    %c0_i32_0 = arith.constant 0 : i32
    %c0_i32_1 = arith.constant 0 : i32
    return %c0_i32, %c0_i32_0 : i32, i32
  }
  func.func @transform_8(%arg0: i32) -> (i32, i32) {
    %c0_i32 = arith.constant 0 : i32
    %c0_i32_0 = arith.constant 0 : i32
    %c0_i32_1 = arith.constant 0 : i32
    return %c0_i32, %c0_i32_0 : i32, i32
  }
  func.func @transform_9(%arg0: i32) -> (i32, i32) {
    %c0_i32 = arith.constant 0 : i32
    %c0_i32_0 = arith.constant 0 : i32
    %c0_i32_1 = arith.constant 0 : i32
    return %c0_i32, %c0_i32_0 : i32, i32
  }
  func.func @transform_10(%arg0: i32) -> (i32, i32) {
    %c0_i32 = arith.constant 0 : i32
    %c0_i32_0 = arith.constant 0 : i32
    %c0_i32_1 = arith.constant 0 : i32
    return %c0_i32, %c0_i32_0 : i32, i32
  }
  func.func @transform_11(%arg0: i32) -> (i32, i32) {
    %c0_i32 = arith.constant 0 : i32
    %c0_i32_0 = arith.constant 0 : i32
    %c0_i32_1 = arith.constant 0 : i32
    return %c0_i32, %c0_i32_0 : i32, i32
  }
  func.func @transform_12(%arg0: i32) -> (i32, i32, i32) {
    %c0_i32 = arith.constant 0 : i32
    %c0_i32_0 = arith.constant 0 : i32
    %c0_i32_1 = arith.constant 0 : i32
    return %arg0, %c0_i32, %c0_i32_0 : i32, i32, i32
  }
}

</mosaic_0001>

<llo_original>
// kernel: cnn_forward.1
$region0: #{cnn_forward.1}
  #allocation0 [shape = 'u32[]', space=smem, size = 0x4, offset = 0x4, fixed_abs, tag = 'smem constant byte address 0x4 - core index']
  #allocation1 [shape = 'u32[144,128]{1,0:T(1,128)}', space=vmem, size = 0x12000, scoped, tag = 'internal scratch']
  #allocation2 [shape = 'bf16[36,286]{1,0:T(8,128)(2,1)}', space=vmem, size = 0x7800, scoped, tag = 'scratch operand']
  #allocation3 [shape = 'bf16[72,78]{1,0:T(8,128)(2,1)}', space=vmem, size = 0x4800, scoped, tag = 'scratch operand']
  %s0 = inlined_call_operand.vmem [shape: bf16[2,4,324], index: 0, kind: input, shape index: {}]
  %s1 = inlined_call_operand.vmem [shape: bf16[8,36], index: 1, kind: input, shape index: {}]
  %s2 = inlined_call_operand.vmem [shape: f32[8,1], index: 2, kind: input, shape index: {}]
  %s3 = inlined_call_operand.vmem [shape: bf16[8,72], index: 3, kind: input, shape index: {}]
  %s4 = inlined_call_operand.vmem [shape: f32[8,1], index: 4, kind: input, shape index: {}]
  %s5 = inlined_call_operand.vmem [shape: bf16[267,100], index: 5, kind: input, shape index: {}]
  %s6 = inlined_call_operand.vmem [shape: bf16[67,128], index: 6, kind: input, shape index: {}]
  %s7 = inlined_call_operand.vmem [shape: f32[8,128], index: 7, kind: input, shape index: {}]
  %s8 = inlined_call_operand.vmem [shape: bf16[128,32], index: 8, kind: input, shape index: {}]
  %s9 = inlined_call_operand.vmem [shape: f32[1,32], index: 9, kind: input, shape index: {}]
  %s10 = inlined_call_operand.vmem [shape: bf16[32,10], index: 10, kind: input, shape index: {}]
  %s11 = inlined_call_operand.vmem [shape: f32[1,10], index: 11, kind: input, shape index: {}]
  %s12 = inlined_call_operand.hbm [shape: f32[2,1,10], index: 12, kind: output, shape index: {}]
  %s13 = sld [smem:[#allocation0]]
  $region81: #{cnn_forward.1} parent=0
    _
  %s15 = ssub.s32 1, %s13
  %s16 = scalar_select 0, %s15, %s13
  $region1: #{cnn_forward.1} parent=0
    #allocation4 [shape = 'u8[1024]{0}', space=vmem, size = 0x400, scoped, tag = 'output window, operand 0']
    #allocation5 [shape = 's32[2]{0}', space=sflag, size = 0x8, scoped, tag = 'scoped memory for cnn_forward.1']
    %17 = vsyncpa [#allocation5], 0
    %s18 = scalar_lea.sflag [#allocation5], 1
    %19 = vsyncpa %s18, 0
    loop: start=0, step=1, limit=4
    $region2: #{cnn_forward.1} parent=1 // loop_pre_header
      _
    $region3: #{cnn_forward.1} parent=1 // loop_header
      %s21 = sphi 0, %s25
      %p22 = scmp.ge.s32.totalorder %s21, 4
      %s31 = sphi 0, %s33
      %s34 = sphi 0, %s31
      %s35 = sphi 0, %s34
      %s51 = sphi 0, %s35
      %s55 = sphi 0, %s55
      %s57 = sphi 0, %s55
      %s58 = sphi 0, %s57
      %s72 = sphi 0, %s58
      %s76 = sphi 0, %s76
      %s78 = sphi 0, %s76
      %s79 = sphi 0, %s78
      %s93 = sphi 0, %s79
      %s97 = sphi 0, %s97
      %s99 = sphi 0, %s97
      %s100 = sphi 0, %s99
      %s114 = sphi 0, %s100
      %s118 = sphi 0, %s118
      %s120 = sphi 0, %s118
      %s121 = sphi 0, %s120
      %s135 = sphi 0, %s121
      %s139 = sphi 0, %s139
      %s141 = sphi 0, %s139
      %s142 = sphi 0, %s141
      %s156 = sphi 0, %s142
      %s160 = sphi 0, %s160
      %s162 = sphi 0, %s160
      %s163 = sphi 0, %s162
      %s177 = sphi 0, %s163
      %s181 = sphi 0, %s181
      %s183 = sphi 0, %s181
      %s184 = sphi 0, %s183
      %s198 = sphi 0, %s184
      %s202 = sphi 0, %s202
      %s204 = sphi 0, %s202
      %s205 = sphi 0, %s204
      %s219 = sphi 0, %s205
      %s223 = sphi 0, %s223
      %s225 = sphi 0, %s223
      %s226 = sphi 0, %s225
      %s240 = sphi 0, %s226
      %s244 = sphi 0, %s244
      %s246 = sphi 0, %s244
      %s247 = sphi 0, %s246
      %s261 = sphi 0, %s247
      %s265 = sphi 0, %s265
      %s267 = sphi 0, %s265
      %s268 = sphi 0, %s267
      %s282 = sphi 0, %s268
      %s288 = sphi 0, %s290
      %s291 = sphi 0, %s288
      %s292 = sphi 0, %s291
      %s308 = sphi 0, %s292
    $region4: #{cnn_forward.1} parent=1 // loop_header_branch
      %24 = sbr.rel (%p22) target = $region8
    $region5: #{cnn_forward.1} parent=1 // loop_body
      %s26 = ssub.s32 %s21, 1
      %s27 = ssub.s32 %s21, 2
      %s28 = sadd.s32 %s21, 1
      %s29 = ssub.s32 %s21, %s28
      %p30 = scmp.eq.s32.totalorder %s29, 0
      %s32 = sadd.s32 %s31, 1
      %s33 = scalar_select %p30, %s31, %s32
      %p36 = pneg %p30
      %p37 = scmp.eq.s32.totalorder %s21, 1
      %p38 = por %p36, %p37
      %p39 = scmp.ne.s32.totalorder %s31, %s34
      %p40 = scmp.eq.s32.totalorder %s21, 0
      %p41 = por %p39, %p40
      %p42 = scmp.ne.s32.totalorder %s31, %s34
      %p43 = scmp.eq.s32.totalorder %s26, 1
      %p44 = por %p42, %p43
      %p45 = scmp.ne.s32.totalorder %s34, %s35
      %p46 = scmp.eq.s32.totalorder %s26, 0
      %p47 = por %p45, %p46
      %p48 = scmp.ne.s32.totalorder %s34, %s35
      %p49 = scmp.eq.s32.totalorder %s27, 1
      %p50 = por %p48, %p49
      %p52 = scmp.ne.s32.totalorder %s35, %s51
      %p53 = scmp.eq.s32.totalorder %s27, 0
      %p54 = por %p52, %p53
      %s56 = sadd.s32 %s55, 1
      %p59 = scmp.eq.s32.totalorder %s21, 1
      %p60 = scmp.ne.s32.totalorder %s55, %s57
      %p61 = scmp.eq.s32.totalorder %s21, 0
      %p62 = por %p60, %p61
      %p63 = scmp.ne.s32.totalorder %s55, %s57
      %p64 = scmp.eq.s32.totalorder %s26, 1
      %p65 = por %p63, %p64
      %p66 = scmp.ne.s32.totalorder %s57, %s58
      %p67 = scmp.eq.s32.totalorder %s26, 0
      %p68 = por %p66, %p67
      %p69 = scmp.ne.s32.totalorder %s57, %s58
      %p70 = scmp.eq.s32.totalorder %s27, 1
      %p71 = por %p69, %p70
      %p73 = scmp.ne.s32.totalorder %s58, %s72
      %p74 = scmp.eq.s32.totalorder %s27, 0
      %p75 = por %p73, %p74
      %s77 = sadd.s32 %s76, 1
      %p80 = scmp.eq.s32.totalorder %s21, 1
      %p81 = scmp.ne.s32.totalorder %s76, %s78
      %p82 = scmp.eq.s32.totalorder %s21, 0
      %p83 = por %p81, %p82
      %p84 = scmp.ne.s32.totalorder %s76, %s78
      %p85 = scmp.eq.s32.totalorder %s26, 1
      %p86 = por %p84, %p85
      %p87 = scmp.ne.s32.totalorder %s78, %s79
      %p88 = scmp.eq.s32.totalorder %s26, 0
      %p89 = por %p87, %p88
      %p90 = scmp.ne.s32.totalorder %s78, %s79
      %p91 = scmp.eq.s32.totalorder %s27, 1
      %p92 = por %p90, %p91
      %p94 = scmp.ne.s32.totalorder %s79, %s93
      %p95 = scmp.eq.s32.totalorder %s27, 0
      %p96 = por %p94, %p95
      %s98 = sadd.s32 %s97, 1
      %p101 = scmp.eq.s32.totalorder %s21, 1
      %p102 = scmp.ne.s32.totalorder %s97, %s99
      %p103 = scmp.eq.s32.totalorder %s21, 0
      %p104 = por %p102, %p103
      %p105 = scmp.ne.s32.totalorder %s97, %s99
      %p106 = scmp.eq.s32.totalorder %s26, 1
      %p107 = por %p105, %p106
      %p108 = scmp.ne.s32.totalorder %s99, %s100
      %p109 = scmp.eq.s32.totalorder %s26, 0
      %p110 = por %p108, %p109
      %p111 = scmp.ne.s32.totalorder %s99, %s100
      %p112 = scmp.eq.s32.totalorder %s27, 1
      %p113 = por %p111, %p112
      %p115 = scmp.ne.s32.totalorder %s100, %s114
      %p116 = scmp.eq.s32.totalorder %s27, 0
      %p117 = por %p115, %p116
      %s119 = sadd.s32 %s118, 1
      %p122 = scmp.eq.s32.totalorder %s21, 1
      %p123 = scmp.ne.s32.totalorder %s118, %s120
      %p124 = scmp.eq.s32.totalorder %s21, 0
      %p125 = por %p123, %p124
      %p126 = scmp.ne.s32.totalorder %s118, %s120
      %p127 = scmp.eq.s32.totalorder %s26, 1
      %p128 = por %p126, %p127
      %p129 = scmp.ne.s32.totalorder %s120, %s121
      %p130 = scmp.eq.s32.totalorder %s26, 0
      %p131 = por %p129, %p130
      %p132 = scmp.ne.s32.totalorder %s120, %s121
      %p133 = scmp.eq.s32.totalorder %s27, 1
      %p134 = por %p132, %p133
      %p136 = scmp.ne.s32.totalorder %s121, %s135
      %p137 = scmp.eq.s32.totalorder %s27, 0
      %p138 = por %p136, %p137
      %s140 = sadd.s32 %s139, 1
      %p143 = scmp.eq.s32.totalorder %s21, 1
      %p144 = scmp.ne.s32.totalorder %s139, %s141
      %p145 = scmp.eq.s32.totalorder %s21, 0
      %p146 = por %p144, %p145
      %p147 = scmp.ne.s32.totalorder %s139, %s141
      %p148 = scmp.eq.s32.totalorder %s26, 1
      %p149 = por %p147, %p148
      %p150 = scmp.ne.s32.totalorder %s141, %s142
      %p151 = scmp.eq.s32.totalorder %s26, 0
      %p152 = por %p150, %p151
      %p153 = scmp.ne.s32.totalorder %s141, %s142
      %p154 = scmp.eq.s32.totalorder %s27, 1
      %p155 = por %p153, %p154
      %p157 = scmp.ne.s32.totalorder %s142, %s156
      %p158 = scmp.eq.s32.totalorder %s27, 0
      %p159 = por %p157, %p158
      %s161 = sadd.s32 %s160, 1
      %p164 = scmp.eq.s32.totalorder %s21, 1
      %p165 = scmp.ne.s32.totalorder %s160, %s162
      %p166 = scmp.eq.s32.totalorder %s21, 0
      %p167 = por %p165, %p166
      %p168 = scmp.ne.s32.totalorder %s160, %s162
      %p169 = scmp.eq.s32.totalorder %s26, 1
      %p170 = por %p168, %p169
      %p171 = scmp.ne.s32.totalorder %s162, %s163
      %p172 = scmp.eq.s32.totalorder %s26, 0
      %p173 = por %p171, %p172
      %p174 = scmp.ne.s32.totalorder %s162, %s163
      %p175 = scmp.eq.s32.totalorder %s27, 1
      %p176 = por %p174, %p175
      %p178 = scmp.ne.s32.totalorder %s163, %s177
      %p179 = scmp.eq.s32.totalorder %s27, 0
      %p180 = por %p178, %p179
      %s182 = sadd.s32 %s181, 1
      %p185 = scmp.eq.s32.totalorder %s21, 1
      %p186 = scmp.ne.s32.totalorder %s181, %s183
      %p187 = scmp.eq.s32.totalorder %s21, 0
      %p188 = por %p186, %p187
      %p189 = scmp.ne.s32.totalorder %s181, %s183
      %p190 = scmp.eq.s32.totalorder %s26, 1
      %p191 = por %p189, %p190
      %p192 = scmp.ne.s32.totalorder %s183, %s184
      %p193 = scmp.eq.s32.totalorder %s26, 0
      %p194 = por %p192, %p193
      %p195 = scmp.ne.s32.totalorder %s183, %s184
      %p196 = scmp.eq.s32.totalorder %s27, 1
      %p197 = por %p195, %p196
      %p199 = scmp.ne.s32.totalorder %s184, %s198
      %p200 = scmp.eq.s32.totalorder %s27, 0
      %p201 = por %p199, %p200
      %s203 = sadd.s32 %s202, 1
      %p206 = scmp.eq.s32.totalorder %s21, 1
      %p207 = scmp.ne.s32.totalorder %s202, %s204
      %p208 = scmp.eq.s32.totalorder %s21, 0
      %p209 = por %p207, %p208
      %p210 = scmp.ne.s32.totalorder %s202, %s204
      %p211 = scmp.eq.s32.totalorder %s26, 1
      %p212 = por %p210, %p211
      %p213 = scmp.ne.s32.totalorder %s204, %s205
      %p214 = scmp.eq.s32.totalorder %s26, 0
      %p215 = por %p213, %p214
      %p216 = scmp.ne.s32.totalorder %s204, %s205
      %p217 = scmp.eq.s32.totalorder %s27, 1
      %p218 = por %p216, %p217
      %p220 = scmp.ne.s32.totalorder %s205, %s219
      %p221 = scmp.eq.s32.totalorder %s27, 0
      %p222 = por %p220, %p221
      %s224 = sadd.s32 %s223, 1
      %p227 = scmp.eq.s32.totalorder %s21, 1
      %p228 = scmp.ne.s32.totalorder %s223, %s225
      %p229 = scmp.eq.s32.totalorder %s21, 0
      %p230 = por %p228, %p229
      %p231 = scmp.ne.s32.totalorder %s223, %s225
      %p232 = scmp.eq.s32.totalorder %s26, 1
      %p233 = por %p231, %p232
      %p234 = scmp.ne.s32.totalorder %s225, %s226
      %p235 = scmp.eq.s32.totalorder %s26, 0
      %p236 = por %p234, %p235
      %p237 = scmp.ne.s32.totalorder %s225, %s226
      %p238 = scmp.eq.s32.totalorder %s27, 1
      %p239 = por %p237, %p238
      %p241 = scmp.ne.s32.totalorder %s226, %s240
      %p242 = scmp.eq.s32.totalorder %s27, 0
      %p243 = por %p241, %p242
      %s245 = sadd.s32 %s244, 1
      %p248 = scmp.eq.s32.totalorder %s21, 1
      %p249 = scmp.ne.s32.totalorder %s244, %s246
      %p250 = scmp.eq.s32.totalorder %s21, 0
      %p251 = por %p249, %p250
      %p252 = scmp.ne.s32.totalorder %s244, %s246
      %p253 = scmp.eq.s32.totalorder %s26, 1
      %p254 = por %p252, %p253
      %p255 = scmp.ne.s32.totalorder %s246, %s247
      %p256 = scmp.eq.s32.totalorder %s26, 0
      %p257 = por %p255, %p256
      %p258 = scmp.ne.s32.totalorder %s246, %s247
      %p259 = scmp.eq.s32.totalorder %s27, 1
      %p260 = por %p258, %p259
      %p262 = scmp.ne.s32.totalorder %s247, %s261
      %p263 = scmp.eq.s32.totalorder %s27, 0
      %p264 = por %p262, %p263
      %s266 = sadd.s32 %s265, 1
      %p269 = scmp.eq.s32.totalorder %s21, 1
      %p270 = scmp.ne.s32.totalorder %s265, %s267
      %p271 = scmp.eq.s32.totalorder %s21, 0
      %p272 = por %p270, %p271
      %p273 = scmp.ne.s32.totalorder %s265, %s267
      %p274 = scmp.eq.s32.totalorder %s26, 1
      %p275 = por %p273, %p274
      %p276 = scmp.ne.s32.totalorder %s267, %s268
      %p277 = scmp.eq.s32.totalorder %s26, 0
      %p278 = por %p276, %p277
      %p279 = scmp.ne.s32.totalorder %s267, %s268
      %p280 = scmp.eq.s32.totalorder %s27, 1
      %p281 = por %p279, %p280
      %p283 = scmp.ne.s32.totalorder %s268, %s282
      %p284 = scmp.eq.s32.totalorder %s27, 0
      %p285 = por %p283, %p284
      %s286 = ssub.s32 %s21, %s28
      %p287 = scmp.eq.s32.totalorder %s286, 0
      %s289 = sadd.s32 %s288, 1
      %s290 = scalar_select %p287, %s288, %s289
      %p293 = pneg %p287
      %p294 = scmp.eq.s32.totalorder %s21, 1
      %p295 = por %p293, %p294
      %p296 = scmp.ne.s32.totalorder %s288, %s291
      %p297 = scmp.eq.s32.totalorder %s21, 0
      %p298 = por %p296, %p297
      %p299 = scmp.ne.s32.totalorder %s288, %s291
      %p300 = scmp.eq.s32.totalorder %s26, 1
      %p301 = por %p299, %p300
      %p302 = scmp.ne.s32.totalorder %s291, %s292
      %p303 = scmp.eq.s32.totalorder %s26, 0
      %p304 = por %p302, %p303
      %p305 = scmp.ne.s32.totalorder %s291, %s292
      %p306 = scmp.eq.s32.totalorder %s27, 1
      %p307 = por %p305, %p306
      %p309 = scmp.ne.s32.totalorder %s292, %s308
      %p310 = scmp.eq.s32.totalorder %s27, 0
      %p311 = por %p309, %p310
      %p312 = scmp.le.s32.totalorder 1, %s21
      %p313 = scmp.lt.s32.totalorder %s21, 3
      %p314 = pnand %p312, %p313
      %p315 = pneg %p314
      // Predicated region
      $region9: #{cnn_forward.1} parent=5 // pred_check
        _
      $region10: #{cnn_forward.1} parent=5 // pred_check_branch
        %317 = sbr.rel (%p314) target = $region12
      $region11: #{cnn_forward.1} parent=5 // pred_region
        %s318 = ssub.s32 %s21, 1
        // Predicated region
        $region13: #{cnn_forward.1} parent=11 // pred_check
          %p319 = pneg %p68
        $region14: #{cnn_forward.1} parent=11 // pred_check_branch
          %321 = sbr.rel (%p319) target = $region16
        $region15: #{cnn_forward.1} parent=11 // pred_region
          _
        $region16: #{cnn_forward.1} parent=11 // pred_fallthru
          _
        // Predicated region
        $region17: #{cnn_forward.1} parent=11 // pred_check
          %p322 = pneg %p89
        $region18: #{cnn_forward.1} parent=11 // pred_check_branch
          %324 = sbr.rel (%p322) target = $region20
        $region19: #{cnn_forward.1} parent=11 // pred_region
          _
        $region20: #{cnn_forward.1} parent=11 // pred_fallthru
          _
        // Predicated region
        $region21: #{cnn_forward.1} parent=11 // pred_check
          %p325 = pneg %p110
        $region22: #{cnn_forward.1} parent=11 // pred_check_branch
          %327 = sbr.rel (%p325) target = $region24
        $region23: #{cnn_forward.1} parent=11 // pred_region
          _
        $region24: #{cnn_forward.1} parent=11 // pred_fallthru
          _
        // Predicated region
        $region25: #{cnn_forward.1} parent=11 // pred_check
          %p328 = pneg %p131
        $region26: #{cnn_forward.1} parent=11 // pred_check_branch
          %330 = sbr.rel (%p328) target = $region28
        $region27: #{cnn_forward.1} parent=11 // pred_region
          _
        $region28: #{cnn_forward.1} parent=11 // pred_fallthru
          _
        // Predicated region
        $region29: #{cnn_forward.1} parent=11 // pred_check
          %p331 = pneg %p152
        $region30: #{cnn_forward.1} parent=11 // pred_check_branch
          %333 = sbr.rel (%p331) target = $region32
        $region31: #{cnn_forward.1} parent=11 // pred_region
          _
        $region32: #{cnn_forward.1} parent=11 // pred_fallthru
          _
        // Predicated region
        $region33: #{cnn_forward.1} parent=11 // pred_check
          %p334 = pneg %p173
        $region34: #{cnn_forward.1} parent=11 // pred_check_branch
          %336 = sbr.rel (%p334) target = $region36
        $region35: #{cnn_forward.1} parent=11 // pred_region
          _
        $region36: #{cnn_forward.1} parent=11 // pred_fallthru
          _
        // Predicated region
        $region37: #{cnn_forward.1} parent=11 // pred_check
          %p337 = pneg %p194
        $region38: #{cnn_forward.1} parent=11 // pred_check_branch
          %339 = sbr.rel (%p337) target = $region40
        $region39: #{cnn_forward.1} parent=11 // pred_region
          _
        $region40: #{cnn_forward.1} parent=11 // pred_fallthru
          _
        // Predicated region
        $region41: #{cnn_forward.1} parent=11 // pred_check
          %p340 = pneg %p215
        $region42: #{cnn_forward.1} parent=11 // pred_check_branch
          %342 = sbr.rel (%p340) target = $region44
        $region43: #{cnn_forward.1} parent=11 // pred_region
          _
        $region44: #{cnn_forward.1} parent=11 // pred_fallthru
          _
        // Predicated region
        $region45: #{cnn_forward.1} parent=11 // pred_check
          %p343 = pneg %p236
        $region46: #{cnn_forward.1} parent=11 // pred_check_branch
          %345 = sbr.rel (%p343) target = $region48
        $region47: #{cnn_forward.1} parent=11 // pred_region
          _
        $region48: #{cnn_forward.1} parent=11 // pred_fallthru
          _
        // Predicated region
        $region49: #{cnn_forward.1} parent=11 // pred_check
          %p346 = pneg %p257
        $region50: #{cnn_forward.1} parent=11 // pred_check_branch
          %348 = sbr.rel (%p346) target = $region52
        $region51: #{cnn_forward.1} parent=11 // pred_region
          _
        $region52: #{cnn_forward.1} parent=11 // pred_fallthru
          _
        // Predicated region
        $region53: #{cnn_forward.1} parent=11 // pred_check
          %p349 = pneg %p278
        $region54: #{cnn_forward.1} parent=11 // pred_check_branch
          %351 = sbr.rel (%p349) target = $region56
        $region55: #{cnn_forward.1} parent=11 // pred_region
          _
        $region56: #{cnn_forward.1} parent=11 // pred_fallthru
          _
      $region12: #{cnn_forward.1} parent=5 // pred_fallthru
        _
      %p352 = scmp.lt.s32.totalorder %s21, 2
      // Predicated region
      $region57: #{cnn_forward.1} parent=5 // pred_check
        %p353 = pneg %p352
      $region58: #{cnn_forward.1} parent=5 // pred_check_branch
        %355 = sbr.rel (%p353) target = $region60
      $region59: #{cnn_forward.1} parent=5 // pred_region
        // Predicated region
        $region61: #{cnn_forward.1} parent=59 // pred_check
          %p356 = pneg %p41
        $region62: #{cnn_forward.1} parent=59 // pred_check_branch
          %358 = sbr.rel (%p356) target = $region64
        $region63: #{cnn_forward.1} parent=59 // pred_region
          %p359 = scmp.lt.s32.totalorder %s21, 1
          %s360 = scalar_select %p359, %s21, 1
          %s361 = smul.addr %s360, 3
          %s362 = smul.addr %s361, 2
          %s363 = scalar_lea.vmem %s0, %s362
        $region64: #{cnn_forward.1} parent=59 // pred_fallthru
          _
      $region60: #{cnn_forward.1} parent=5 // pred_fallthru
        _
      %p364 = scmp.le.s32.totalorder 1, %s21
      %p365 = scmp.lt.s32.totalorder %s21, 3
      %p366 = pnand %p364, %p365
      %p367 = pneg %p366
      // Predicated region
      $region65: #{cnn_forward.1} parent=5 // pred_check
        _
      $region66: #{cnn_forward.1} parent=5 // pred_check_branch
        %369 = sbr.rel (%p366) target = $region68
      $region67: #{cnn_forward.1} parent=5 // pred_region
        %s370 = ssub.s32 %s21, 1
        %p371 = scmp.lt.s32.totalorder %s26, 1
        %s372 = scalar_select %p371, %s26, 1
        %s373 = smul.addr %s372, 3
        %s374 = smul.addr %s373, 2
        %s375 = scalar_lea.vmem %s0, %s374
        %p376 = pneg %p47
        %p377 = pneg %p44
        %p378 = pneg %p68
        %p379 = pneg %p65
        %p380 = pneg %p89
        %p381 = pneg %p86
        %p382 = pneg %p110
        %p383 = pneg %p107
        %p384 = pneg %p131
        %p385 = pneg %p128
        %p386 = pneg %p152
        %p387 = pneg %p149
        %p388 = pneg %p173
        %p389 = pneg %p170
        %p390 = pneg %p194
        %p391 = pneg %p191
        %p392 = pneg %p215
        %p393 = pneg %p212
        %p394 = pneg %p236
        %p395 = pneg %p233
        %p396 = pneg %p257
        %p397 = pneg %p254
        %p398 = pneg %p278
        %p399 = pneg %p275
        %p400 = pneg %p304
        %p401 = pneg %p301
        %s402 = sand.u32 %s291, 1
        %s403 = scalar_lea.sflag [#allocation5], %s402
        %s404 = sand.u32 %s291, 1
        %s405 = scalar_lea.vmem [#allocation4], %s404
        %p406 = scmp.lt.s32.totalorder %s26, 1
        %s407 = scalar_select %p406, %s26, 1
        %s408 = smul.addr %s407, 3
        %s409 = smul.addr %s408, 2
        %s410 = scalar_lea.vmem %s0, %s409
        %v412 = vld [vmem:[%s410] sm:$0x3f]
        %v414 = vcombine.high %v412, %v412
        %v416 = vunpack.c.l.s4 1983009808
        %v417 = vunpack.c.0.s8 %v416
        %v418 = vlaneseq
        %v419 = vshrl.u32 %v418, 7
        %v420 = vsub.s32 %v417, %v419
        %v421 = vrot.slane %v412, %v420
        %v423 = vunpack.c.l.s4 1983009808
        %v424 = vunpack.c.0.s8 %v423
        %v425 = vlaneseq
        %v426 = vshrl.u32 %v425, 7
        %v427 = vsub.s32 %v424, %v426
        %v428 = vrot.slane %v414, %v427
        %431 = vst [vmem:[#allocation2] sm:$0x33] %v421
        %vm432 = vcmask 238592
        %433 = vst.msk [vmem:[#allocation2 + $0x8] sm:$0x3] %vm432, %v428
        %v434 = vcombine.low %v412, %v412
        %v436 = vunpack.c.l.s4 1983009808
        %v437 = vunpack.c.0.s8 %v436
        %v438 = vlaneseq
        %v439 = vshrl.u32 %v438, 7
        %v440 = vsub.s32 %v437, %v439
        %v441 = vrot.slane %v434, %v440
        %442 = vrot.lane.b32.xlu0 %v441, 127
        %v443 = vpop.permute.xlu0 %442
        %444 = vrot.lane.b32.xlu0 %v421, 127
        %v445 = vpop.permute.xlu0 %444
        %v446 = vrot.slane %v443, 4
        %v447 = vrot.slane %v445, 4
        %vm448 = vcmask 1043456
        %v449 = vsel %vm448, %v446, %v447
        %vm450 = vcmask 1039360
        %v451 = vsel %vm450, %v443, %v449
        %454 = vst [vmem:[#allocation2] sm:$0xcc] %v451
        %vm455 = vcmask 240642
        %456 = vst.msk [vmem:[#allocation2 + $0x8] sm:$0xc] %vm455, %v445
        %457 = vrot.lane.b32.xlu0 %v421, 126
        %v458 = vpop.permute.xlu0 %457
        %459 = vrot.lane.b32.xlu0 %v428, 126
        %v460 = vpop.permute.xlu0 %459
        %v461 = vrot.slane %v458, 4
        %v462 = vrot.slane %v460, 4
        %v463 = vsel %vm448, %v461, %v462
        %vm464 = vcmask 1031168
        %v465 = vsel %vm464, %v458, %v463
        %468 = vst [vmem:[#allocation2 + $0xc] sm:$0x33] %v465
        %469 = vst.msk [vmem:[#allocation2 + $0x14] sm:$0x3] %vm432, %v460
        %470 = vrot.lane.b32.xlu0 %v441, 110
        %v471 = vpop.permute.xlu0 %470
        %472 = vrot.lane.b32.xlu0 %v421, 110
        %v473 = vpop.permute.xlu0 %472
        %v474 = vrot.slane %v471, 4
        %v475 = vrot.slane %v473, 4
        %v476 = vsel %vm448, %v474, %v475
        %vm477 = vcmask 900096
        %v478 = vsel %vm477, %v471, %v476
        %481 = vst [vmem:[#allocation2 + $0xc] sm:$0xcc] %v478
        %482 = vst.msk [vmem:[#allocation2 + $0x14] sm:$0xc] %vm455, %v473
        %483 = vrot.lane.b32.xlu0 %v421, 109
        %v484 = vpop.permute.xlu0 %483
        %485 = vrot.lane.b32.xlu0 %v428, 109
        %v486 = vpop.permute.xlu0 %485
        %v487 = vrot.slane %v484, 4
        %v488 = vrot.slane %v486, 4
        %v489 = vsel %vm448, %v487, %v488
        %vm490 = vcmask 891904
        %v491 = vsel %vm490, %v484, %v489
        %494 = vst [vmem:[#allocation2 + $0x18] sm:$0x33] %v491
        %495 = vst.msk [vmem:[#allocation2 + $0x20] sm:$0x3] %vm432, %v486
        %496 = vrot.lane.b32.xlu0 %v441, 108
        %v497 = vpop.permute.xlu0 %496
        %498 = vrot.lane.b32.xlu0 %v421, 108
        %v499 = vpop.permute.xlu0 %498
        %v500 = vrot.slane %v497, 4
        %v501 = vrot.slane %v499, 4
        %v502 = vsel %vm448, %v500, %v501
        %vm503 = vcmask 883712
        %v504 = vsel %vm503, %v497, %v502
        %507 = vst [vmem:[#allocation2 + $0x18] sm:$0xcc] %v504
        %508 = vst.msk [vmem:[#allocation2 + $0x20] sm:$0xc] %vm455, %v499
        %509 = vrot.lane.b32.xlu0 %v421, 92
        %v510 = vpop.permute.xlu0 %509
        %511 = vrot.lane.b32.xlu0 %v428, 92
        %v512 = vpop.permute.xlu0 %511
        %v513 = vrot.slane %v510, 4
        %v514 = vrot.slane %v512, 4
        %v515 = vsel %vm448, %v513, %v514
        %vm516 = vcmask 752640
        %v517 = vsel %vm516, %v510, %v515
        %520 = vst [vmem:[#allocation2 + $0x24] sm:$0x33] %v517
        %521 = vst.msk [vmem:[#allocation2 + $0x2c] sm:$0x3] %vm432, %v512
        %522 = vrot.lane.b32.xlu0 %v441, 91
        %v523 = vpop.permute.xlu0 %522
        %524 = vrot.lane.b32.xlu0 %v421, 91
        %v525 = vpop.permute.xlu0 %524
        %v526 = vrot.slane %v523, 4
        %v527 = vrot.slane %v525, 4
        %v528 = vsel %vm448, %v526, %v527
        %vm529 = vcmask 744448
        %v530 = vsel %vm529, %v523, %v528
        %533 = vst [vmem:[#allocation2 + $0x24] sm:$0xcc] %v530
        %534 = vst.msk [vmem:[#allocation2 + $0x2c] sm:$0xc] %vm455, %v525
        %535 = vrot.lane.b32.xlu0 %v421, 90
        %v536 = vpop.permute.xlu0 %535
        %537 = vrot.lane.b32.xlu0 %v428, 90
        %v538 = vpop.permute.xlu0 %537
        %v539 = vrot.slane %v536, 4
        %v540 = vrot.slane %v538, 4
        %v541 = vsel %vm448, %v539, %v540
        %vm542 = vcmask 736256
        %v543 = vsel %vm542, %v536, %v541
        %546 = vst [vmem:[#allocation2 + $0x30] sm:$0x33] %v543
        %547 = vst.msk [vmem:[#allocation2 + $0x38] sm:$0x3] %vm432, %v538
        %v548 = vld [vmem:[%s1] sm:$0xf]
        %v549 = vld [vmem:[#allocation2] sm:$0xff]
        %v550 = vld [vmem:[#allocation2 + $0x8] sm:$0xf]
        %v551 = vld [vmem:[#allocation2 + $0xc] sm:$0xff]
        %v552 = vld [vmem:[#allocation2 + $0x14] sm:$0xf]
        %v553 = vld [vmem:[#allocation2 + $0x18] sm:$0xff]
        %v554 = vld [vmem:[#allocation2 + $0x20] sm:$0xf]
        %v555 = vld [vmem:[#allocation2 + $0x24] sm:$0xff]
        %v556 = vld [vmem:[#allocation2 + $0x2c] sm:$0xf]
        %v557 = vld [vmem:[#allocation2 + $0x30] sm:$0x33]
        %v558 = vld [vmem:[#allocation2 + $0x38] sm:$0x3]
        %v559 = vld [vmem:[%s2] sm:$0xff]
        %561 = vset.pattern.permute.xlu0 0
        %562 = vperm.xlu0 %561, %v559
        %v563 = vpop.permute.xlu0 %562
        %v575 = vunpack.c.l.b16 %v549
        %v576 = vunpack.c.h.b16 %v549
        %v577 = vunpack.c.l.b16 %v550
        %v578 = vunpack.c.l.b16 %v551
        %v579 = vunpack.c.h.b16 %v551
        %v580 = vunpack.c.l.b16 %v552
        %v581 = vunpack.c.l.b16 %v553
        %v582 = vunpack.c.h.b16 %v553
        %v583 = vunpack.c.l.b16 %v554
        %v584 = vunpack.c.l.b16 %v555
        %v585 = vunpack.c.h.b16 %v555
        %v586 = vunpack.c.l.b16 %v556
        %v587 = vunpack.c.l.b16 %v557
        %v588 = vunpack.c.h.b16 %v557
        %v589 = vunpack.c.l.b16 %v558
        %v590 = vpack.c.b16 %v578, %v575
        %v591 = vpack.c.b16 %v579, %v576
        %v592 = vpack.c.b16 %v580, %v577
        %v593 = vpack.c.b16 %v584, %v581
        %v594 = vpack.c.b16 %v585, %v582
        %v595 = vpack.c.b16 %v586, %v583
        %v596 = vpack.c.b16 %v587, %v587
        %v597 = vpack.c.b16 %v588, %v588
        %v598 = vpack.c.b16 %v589, %v589
        %vm605 = vcmask 293888
        %v607 = vsel %vm605, %v548, 0
        %vm609 = vcmask 1041408
        %v611 = vsel %vm609, %v596, 0
        %v614 = vsel %vm609, %v597, 0
        %v617 = vsel %vm609, %v598, 0
        %619 = vmatprep.subr.bf16.mxu0 %v591
        %620 = vmatpush1.bf16.msra.mxu0 %v590
        %621 = vmatprep.subr.bf16.mxu0 %v594
        %622 = vmatpush1.bf16.msra.mxu0 %v593
        %623 = vmatprep.subr.bf16.mxu0 %v614
        %624 = vmatpush1.bf16.msra.mxu0 %v611
        %625 = vmatprep.subr.bf16.mxu0 0
        %626 = vmatpush1.bf16.msra.mxu0 0
        %627 = vmatprep.subr.bf16.mxu0 0
        %628 = vmatpush1.bf16.msra.mxu0 0
        %629 = vmatprep.subr.bf16.mxu0 0
        %630 = vmatpush1.bf16.msra.mxu0 0
        %631 = vmatprep.subr.bf16.mxu0 0
        %632 = vmatpush1.bf16.msra.mxu0 0
        %633 = vmatprep.subr.bf16.mxu0 0
        %634 = vmatpush1.bf16.msra.mxu0 0
        %635 = vmatprep.subr.bf16.mxu0 0
        %636 = vmatpush1.bf16.msra.mxu0 0
        %637 = vmatprep.subr.bf16.mxu0 0
        %638 = vmatpush1.bf16.msra.mxu0 0
        %639 = vmatprep.subr.bf16.mxu0 0
        %640 = vmatpush1.bf16.msra.mxu0 0
        %641 = vmatprep.subr.bf16.mxu0 0
        %642 = vmatpush1.bf16.msra.mxu0 0
        %643 = vmatprep.subr.bf16.mxu0 0
        %644 = vmatpush1.bf16.msra.mxu0 0
        %645 = vmatprep.subr.bf16.mxu0 0
        %646 = vmatpush1.bf16.msra.mxu0 0
        %647 = vmatprep.subr.bf16.mxu0 0
        %648 = vmatpush1.bf16.msra.mxu0 0
        %649 = vmatprep.subr.bf16.mxu0 0
        %650 = vmatpush1.bf16.msra.mxu0 0
        %651 = vmatprep.mubr.bf16.mxu0 0
        %652 = vmatmul.mubr.bf16.gmra.mrb[0].mxu0 %v607
        %v653 = vpop.f32.mrb[0].mxu0
        %v654 = vadd.f32 %v563, %v653
        %v655 = vpop.f32.mrb[0].mxu0
        %v656 = vadd.f32 %v563, %v655
        %v657 = vpop.f32.mrb[0].mxu0
        %v658 = vpop.f32.mrb[0].mxu0
        %659 = vdwg.mxu0
        %660 = vmatprep.subr.bf16.mxu0 0
        %661 = vmatpush1.bf16.msra.mxu0 %v592
        %662 = vmatprep.subr.bf16.mxu0 0
        %663 = vmatpush1.bf16.msra.mxu0 %v595
        %664 = vmatprep.subr.bf16.mxu0 0
        %665 = vmatpush1.bf16.msra.mxu0 %v617
        %666 = vmatprep.subr.bf16.mxu0 0
        %667 = vmatpush1.bf16.msra.mxu0 0
        %668 = vmatprep.subr.bf16.mxu0 0
        %669 = vmatpush1.bf16.msra.mxu0 0
        %670 = vmatprep.subr.bf16.mxu0 0
        %671 = vmatpush1.bf16.msra.mxu0 0
        %672 = vmatprep.subr.bf16.mxu0 0
        %673 = vmatpush1.bf16.msra.mxu0 0
        %674 = vmatprep.subr.bf16.mxu0 0
        %675 = vmatpush1.bf16.msra.mxu0 0
        %676 = vmatprep.subr.bf16.mxu0 0
        %677 = vmatpush1.bf16.msra.mxu0 0
        %678 = vmatprep.subr.bf16.mxu0 0
        %679 = vmatpush1.bf16.msra.mxu0 0
        %680 = vmatprep.subr.bf16.mxu0 0
        %681 = vmatpush1.bf16.msra.mxu0 0
        %682 = vmatprep.subr.bf16.mxu0 0
        %683 = vmatpush1.bf16.msra.mxu0 0
        %684 = vmatprep.subr.bf16.mxu0 0
        %685 = vmatpush1.bf16.msra.mxu0 0
        %686 = vmatprep.subr.bf16.mxu0 0
        %687 = vmatpush1.bf16.msra.mxu0 0
        %688 = vmatprep.subr.bf16.mxu0 0
        %689 = vmatpush1.bf16.msra.mxu0 0
        %690 = vmatprep.subr.bf16.mxu0 0
        %691 = vmatpush1.bf16.msra.mxu0 0
        %692 = vmatprep.mubr.bf16.mxu0 0
        %693 = vmatmul.mubr.bf16.gmra.mrb[0].mxu0 %v607
        %v694 = vpop.f32.mrb[0].mxu0
        %v695 = vadd.f32 %v563, %v694
        %v696 = vpop.f32.mrb[0].mxu0
        %v697 = vpop.f32.mrb[0].mxu0
        %v698 = vpop.f32.mrb[0].mxu0
        %699 = vdwg.mxu0
        %703 = vrot.lane.b32.xlu0 %v654, 127
        %v704 = vpop.permute.xlu0 %703
        %705 = vrot.lane.b32.xlu0 %v656, 127
        %v706 = vpop.permute.xlu0 %705
        %707 = vrot.lane.b32.xlu0 %v695, 127
        %v708 = vpop.permute.xlu0 %707
        %vm709 = vcmask 1039360
        %v710 = vsel %vm709, %v704, %v706
        %v711 = vsel %vm709, %v706, %v708
        %v715 = vmax.f32 %v654, %v710
        %v716 = vmax.f32 %v656, %v711
        %v717 = vmax.f32 %v695, %v708
        %721 = vrot.lane.b32.xlu0 %v715, 110
        %v722 = vpop.permute.xlu0 %721
        %723 = vrot.lane.b32.xlu0 %v716, 110
        %v724 = vpop.permute.xlu0 %723
        %725 = vrot.lane.b32.xlu0 %v717, 110
        %v726 = vpop.permute.xlu0 %725
        %vm727 = vcmask 900096
        %v728 = vsel %vm727, %v722, %v724
        %v729 = vsel %vm727, %v724, %v726
        %v733 = vmax.f32 %v715, %v728
        %v734 = vmax.f32 %v716, %v729
        %v735 = vmax.f32 %v717, %v726
        %v736 = vpack.c.bf16 %v733, %v733
        %v737 = vpack.c.bf16 %v734, %v734
        %v738 = vpack.c.bf16 %v735, %v735
        %v739 = vld [vmem:[%s5] sm:$0xf]
        %v740 = vld [vmem:[%s5 + $0x4] sm:$0xf]
        %v741 = vld [vmem:[%s5 + $0x8] sm:$0xf]
        %v742 = vld [vmem:[%s5 + $0xc] sm:$0xf]
        %v743 = vld [vmem:[%s5 + $0x10] sm:$0xf]
        %v744 = vld [vmem:[%s5 + $0x14] sm:$0xf]
        %v745 = vld [vmem:[%s5 + $0x18] sm:$0xf]
        %v746 = vld [vmem:[%s5 + $0x1c] sm:$0xf]
        %v747 = vld [vmem:[%s5 + $0x20] sm:$0xf]
        %v748 = vld [vmem:[%s5 + $0x24] sm:$0xf]
        %v749 = vld [vmem:[%s5 + $0x28] sm:$0xf]
        %v750 = vld [vmem:[%s5 + $0x2c] sm:$0xf]
        %v751 = vld [vmem:[%s5 + $0x30] sm:$0xf]
        %v752 = vld [vmem:[%s5 + $0x34] sm:$0xf]
        %v753 = vld [vmem:[%s5 + $0x38] sm:$0xf]
        %v754 = vld [vmem:[%s5 + $0x3c] sm:$0xf]
        %v755 = vld [vmem:[%s5 + $0x40] sm:$0xf]
        %v756 = vld [vmem:[%s5 + $0x44] sm:$0xf]
        %v757 = vld [vmem:[%s5 + $0x48] sm:$0xf]
        %v758 = vld [vmem:[%s5 + $0x4c] sm:$0xf]
        %v759 = vld [vmem:[%s5 + $0x50] sm:$0xf]
        %v760 = vld [vmem:[%s5 + $0x54] sm:$0xf]
        %v761 = vld [vmem:[%s5 + $0x58] sm:$0xf]
        %v762 = vld [vmem:[%s5 + $0x5c] sm:$0xf]
        %v763 = vld [vmem:[%s5 + $0x60] sm:$0xf]
        %v764 = vld [vmem:[%s5 + $0x64] sm:$0xf]
        %v765 = vld [vmem:[%s5 + $0x68] sm:$0xf]
        %v766 = vld [vmem:[%s5 + $0x6c] sm:$0xf]
        %v767 = vld [vmem:[%s5 + $0x70] sm:$0xf]
        %v768 = vld [vmem:[%s5 + $0x74] sm:$0xf]
        %v769 = vld [vmem:[%s5 + $0x78] sm:$0xf]
        %v770 = vld [vmem:[%s5 + $0x7c] sm:$0xf]
        %v771 = vld [vmem:[%s5 + $0x80] sm:$0xf]
        %v772 = vld [vmem:[%s5 + $0x84] sm:$0x3]
        %v807 = vunpack.c.l.b16 %v739
        %v808 = vunpack.c.l.b16 %v740
        %v809 = vunpack.c.l.b16 %v741
        %v810 = vunpack.c.l.b16 %v742
        %v811 = vunpack.c.l.b16 %v743
        %v812 = vunpack.c.l.b16 %v744
        %v813 = vunpack.c.l.b16 %v745
        %v814 = vunpack.c.l.b16 %v746
        %v815 = vunpack.c.l.b16 %v747
        %v816 = vunpack.c.l.b16 %v748
        %v817 = vunpack.c.l.b16 %v749
        %v818 = vunpack.c.l.b16 %v750
        %v819 = vunpack.c.l.b16 %v751
        %v820 = vunpack.c.l.b16 %v752
        %v821 = vunpack.c.l.b16 %v753
        %v822 = vunpack.c.l.b16 %v754
        %v823 = vunpack.c.l.b16 %v755
        %v824 = vunpack.c.l.b16 %v756
        %v825 = vunpack.c.l.b16 %v757
        %v826 = vunpack.c.l.b16 %v758
        %v827 = vunpack.c.l.b16 %v759
        %v828 = vunpack.c.l.b16 %v760
        %v829 = vunpack.c.l.b16 %v761
        %v830 = vunpack.c.l.b16 %v762
        %v831 = vunpack.c.l.b16 %v763
        %v832 = vunpack.c.l.b16 %v764
        %v833 = vunpack.c.l.b16 %v765
        %v834 = vunpack.c.l.b16 %v766
        %v835 = vunpack.c.l.b16 %v767
        %v836 = vunpack.c.l.b16 %v768
        %v837 = vunpack.c.l.b16 %v769
        %v838 = vunpack.c.l.b16 %v770
        %v839 = vunpack.c.l.b16 %v771
        %v840 = vunpack.c.l.b16 %v772
        %v841 = vpack.c.b16 %v808, %v807
        %v842 = vpack.c.b16 %v810, %v809
        %v843 = vpack.c.b16 %v812, %v811
        %v844 = vpack.c.b16 %v814, %v813
        %v845 = vpack.c.b16 %v816, %v815
        %v846 = vpack.c.b16 %v818, %v817
        %v847 = vpack.c.b16 %v820, %v819
        %v848 = vpack.c.b16 %v822, %v821
        %v849 = vpack.c.b16 %v824, %v823
        %v850 = vpack.c.b16 %v826, %v825
        %v851 = vpack.c.b16 %v828, %v827
        %v852 = vpack.c.b16 %v830, %v829
        %v853 = vpack.c.b16 %v832, %v831
        %v854 = vpack.c.b16 %v834, %v833
        %v855 = vpack.c.b16 %v836, %v835
        %v856 = vpack.c.b16 %v838, %v837
        %v857 = vpack.c.b16 %v840, %v839
        %vm874 = vcmask 89088
        %v876 = vsel %vm874, %v738, 0
        %vm878 = vcmask 1044480
        %vm879 = vcmask 1045504
        %v880 = vsel %vm878, 4294967295, 65535
        %v881 = vsel %vm879, %v880, 0
        %v883 = vand.u32 %v857, %v881
        %885 = vmatprep.subr.bf16.mxu0 0
        %886 = vmatpush1.bf16.msra.mxu0 %v841
        %887 = vmatprep.subr.bf16.mxu0 0
        %888 = vmatpush1.bf16.msra.mxu0 %v842
        %889 = vmatprep.subr.bf16.mxu0 0
        %890 = vmatpush1.bf16.msra.mxu0 %v843
        %891 = vmatprep.subr.bf16.mxu0 0
        %892 = vmatpush1.bf16.msra.mxu0 %v844
        %893 = vmatprep.subr.bf16.mxu0 0
        %894 = vmatpush1.bf16.msra.mxu0 %v845
        %895 = vmatprep.subr.bf16.mxu0 0
        %896 = vmatpush1.bf16.msra.mxu0 %v846
        %897 = vmatprep.subr.bf16.mxu0 0
        %898 = vmatpush1.bf16.msra.mxu0 %v847
        %899 = vmatprep.subr.bf16.mxu0 0
        %900 = vmatpush1.bf16.msra.mxu0 %v848
        %901 = vmatprep.subr.bf16.mxu0 0
        %902 = vmatpush1.bf16.msra.mxu0 %v849
        %903 = vmatprep.subr.bf16.mxu0 0
        %904 = vmatpush1.bf16.msra.mxu0 %v850
        %905 = vmatprep.subr.bf16.mxu0 0
        %906 = vmatpush1.bf16.msra.mxu0 %v851
        %907 = vmatprep.subr.bf16.mxu0 0
        %908 = vmatpush1.bf16.msra.mxu0 %v852
        %909 = vmatprep.subr.bf16.mxu0 0
        %910 = vmatpush1.bf16.msra.mxu0 %v853
        %911 = vmatprep.subr.bf16.mxu0 0
        %912 = vmatpush1.bf16.msra.mxu0 %v854
        %913 = vmatprep.subr.bf16.mxu0 0
        %914 = vmatpush1.bf16.msra.mxu0 %v855
        %915 = vmatprep.subr.bf16.mxu0 0
        %916 = vmatpush1.bf16.msra.mxu0 %v856
        %917 = vmatprep.mubr.bf16.mxu0 %v737
        %918 = vmatmul.mubr.bf16.gmra.mrb[0].mxu0 %v736
        %v919 = vpop.f32.mrb[0].mxu0
        %v920 = vadd.f32 0.0, %v919
        %v921 = vpop.f32.mrb[0].mxu0
        %v922 = vpop.f32.mrb[0].mxu0
        %v923 = vpop.f32.mrb[0].mxu0
        %924 = vdwg.mxu0
        %925 = vmatprep.subr.bf16.mxu0 0
        %926 = vmatpush1.bf16.msra.mxu0 %v883
        %927 = vmatprep.subr.bf16.mxu0 0
        %928 = vmatpush1.bf16.msra.mxu0 0
        %929 = vmatprep.subr.bf16.mxu0 0
        %930 = vmatpush1.bf16.msra.mxu0 0
        %931 = vmatprep.subr.bf16.mxu0 0
        %932 = vmatpush1.bf16.msra.mxu0 0
        %933 = vmatprep.subr.bf16.mxu0 0
        %934 = vmatpush1.bf16.msra.mxu0 0
        %935 = vmatprep.subr.bf16.mxu0 0
        %936 = vmatpush1.bf16.msra.mxu0 0
        %937 = vmatprep.subr.bf16.mxu0 0
        %938 = vmatpush1.bf16.msra.mxu0 0
        %939 = vmatprep.subr.bf16.mxu0 0
        %940 = vmatpush1.bf16.msra.mxu0 0
        %941 = vmatprep.subr.bf16.mxu0 0
        %942 = vmatpush1.bf16.msra.mxu0 0
        %943 = vmatprep.subr.bf16.mxu0 0
        %944 = vmatpush1.bf16.msra.mxu0 0
        %945 = vmatprep.subr.bf16.mxu0 0
        %946 = vmatpush1.bf16.msra.mxu0 0
        %947 = vmatprep.subr.bf16.mxu0 0
        %948 = vmatpush1.bf16.msra.mxu0 0
        %949 = vmatprep.subr.bf16.mxu0 0
        %950 = vmatpush1.bf16.msra.mxu0 0
        %951 = vmatprep.subr.bf16.mxu0 0
        %952 = vmatpush1.bf16.msra.mxu0 0
        %953 = vmatprep.subr.bf16.mxu0 0
        %954 = vmatpush1.bf16.msra.mxu0 0
        %955 = vmatprep.subr.bf16.mxu0 0
        %956 = vmatpush1.bf16.msra.mxu0 0
        %957 = vmatprep.mubr.bf16.mxu0 0
        %958 = vmatmul.mubr.bf16.gmra.mrb[0].mxu0 %v876
        %v959 = vpop.f32.mrb[0].mxu0
        %v960 = vadd.f32 %v920, %v959
        %v961 = vpop.f32.mrb[0].mxu0
        %v962 = vpop.f32.mrb[0].mxu0
        %v963 = vpop.f32.mrb[0].mxu0
        %964 = vdwg.mxu0
        %v965 = vmax.f32 %v960, 0.0
        %v966 = vpack.c.bf16 %v965, %v965
        %vm967 = vcmask 633856
        %968 = vst.msk [vmem:[#allocation3] sm:$0xf] %vm967, %v966
        %v970 = vunpack.c.l.b16 %v966
        %v971 = vpack.c.b16 %v970, %v970
        %972 = vrot.lane.b32.xlu0 %v971, 127
        %v973 = vpop.permute.xlu0 %972
        %975 = vst.msk [vmem:[#allocation3 + $0x4] sm:$0xf] %vm967, %v973
        %976 = vrot.lane.b32.xlu0 %v971, 126
        %v977 = vpop.permute.xlu0 %976
        %979 = vst.msk [vmem:[#allocation3 + $0x8] sm:$0xf] %vm967, %v977
        %980 = vrot.lane.b32.xlu0 %v971, 118
        %v981 = vpop.permute.xlu0 %980
        %983 = vst.msk [vmem:[#allocation3 + $0xc] sm:$0xf] %vm967, %v981
        %984 = vrot.lane.b32.xlu0 %v971, 117
        %v985 = vpop.permute.xlu0 %984
        %987 = vst.msk [vmem:[#allocation3 + $0x10] sm:$0xf] %vm967, %v985
        %988 = vrot.lane.b32.xlu0 %v971, 116
        %v989 = vpop.permute.xlu0 %988
        %991 = vst.msk [vmem:[#allocation3 + $0x14] sm:$0xf] %vm967, %v989
        %992 = vrot.lane.b32.xlu0 %v971, 108
        %v993 = vpop.permute.xlu0 %992
        %995 = vst.msk [vmem:[#allocation3 + $0x18] sm:$0xf] %vm967, %v993
        %996 = vrot.lane.b32.xlu0 %v971, 107
        %v997 = vpop.permute.xlu0 %996
        %999 = vst.msk [vmem:[#allocation3 + $0x1c] sm:$0xf] %vm967, %v997
        %1000 = vrot.lane.b32.xlu0 %v971, 106
        %v1001 = vpop.permute.xlu0 %1000
        %1003 = vst.msk [vmem:[#allocation3 + $0x20] sm:$0xf] %vm967, %v1001
        %v1004 = vld [vmem:[%s3] sm:$0xf]
        %v1005 = vld [vmem:[#allocation3] sm:$0xf]
        %v1006 = vld [vmem:[#allocation3 + $0x4] sm:$0xf]
        %v1007 = vld [vmem:[#allocation3 + $0x8] sm:$0xf]
        %v1008 = vld [vmem:[#allocation3 + $0xc] sm:$0xf]
        %v1009 = vld [vmem:[#allocation3 + $0x10] sm:$0xf]
        %v1010 = vld [vmem:[#allocation3 + $0x14] sm:$0xf]
        %v1011 = vld [vmem:[#allocation3 + $0x18] sm:$0xf]
        %v1012 = vld [vmem:[#allocation3 + $0x1c] sm:$0xf]
        %v1013 = vld [vmem:[#allocation3 + $0x20] sm:$0xf]
        %v1014 = vld [vmem:[%s4] sm:$0xff]
        %1016 = vset.pattern.permute.xlu0 0
        %1017 = vperm.xlu0 %1016, %v1014
        %v1018 = vpop.permute.xlu0 %1017
        %v1029 = vunpack.c.l.b16 %v1005
        %v1030 = vunpack.c.l.b16 %v1006
        %v1031 = vunpack.c.l.b16 %v1007
        %v1032 = vunpack.c.l.b16 %v1008
        %v1033 = vunpack.c.l.b16 %v1009
        %v1034 = vunpack.c.l.b16 %v1010
        %v1035 = vunpack.c.l.b16 %v1011
        %v1036 = vunpack.c.l.b16 %v1012
        %v1037 = vunpack.c.l.b16 %v1013
        %v1038 = vpack.c.b16 %v1030, %v1029
        %v1039 = vpack.c.b16 %v1032, %v1031
        %v1040 = vpack.c.b16 %v1034, %v1033
        %v1041 = vpack.c.b16 %v1036, %v1035
        %v1042 = vpack.c.b16 %v1037, %v1037
        %vm1047 = vcmask 588800
        %v1049 = vsel %vm1047, %v1004, 0
        %vm1051 = vcmask 1043456
        %v1053 = vsel %vm1051, %v1042, 0
        %1055 = vmatprep.subr.bf16.mxu0 0
        %1056 = vmatpush1.bf16.msra.mxu0 %v1038
        %1057 = vmatprep.subr.bf16.mxu0 0
        %1058 = vmatpush1.bf16.msra.mxu0 %v1039
        %1059 = vmatprep.subr.bf16.mxu0 0
        %1060 = vmatpush1.bf16.msra.mxu0 %v1040
        %1061 = vmatprep.subr.bf16.mxu0 0
        %1062 = vmatpush1.bf16.msra.mxu0 %v1041
        %1063 = vmatprep.subr.bf16.mxu0 0
        %1064 = vmatpush1.bf16.msra.mxu0 %v1053
        %1065 = vmatprep.subr.bf16.mxu0 0
        %1066 = vmatpush1.bf16.msra.mxu0 0
        %1067 = vmatprep.subr.bf16.mxu0 0
        %1068 = vmatpush1.bf16.msra.mxu0 0
        %1069 = vmatprep.subr.bf16.mxu0 0
        %1070 = vmatpush1.bf16.msra.mxu0 0
        %1071 = vmatprep.subr.bf16.mxu0 0
        %1072 = vmatpush1.bf16.msra.mxu0 0
        %1073 = vmatprep.subr.bf16.mxu0 0
        %1074 = vmatpush1.bf16.msra.mxu0 0
        %1075 = vmatprep.subr.bf16.mxu0 0
        %1076 = vmatpush1.bf16.msra.mxu0 0
        %1077 = vmatprep.subr.bf16.mxu0 0
        %1078 = vmatpush1.bf16.msra.mxu0 0
        %1079 = vmatprep.subr.bf16.mxu0 0
        %1080 = vmatpush1.bf16.msra.mxu0 0
        %1081 = vmatprep.subr.bf16.mxu0 0
        %1082 = vmatpush1.bf16.msra.mxu0 0
        %1083 = vmatprep.subr.bf16.mxu0 0
        %1084 = vmatpush1.bf16.msra.mxu0 0
        %1085 = vmatprep.subr.bf16.mxu0 0
        %1086 = vmatpush1.bf16.msra.mxu0 0
        %1087 = vmatprep.mubr.bf16.mxu0 0
        %1088 = vmatmul.mubr.bf16.gmra.mrb[0].mxu0 %v1049
        %v1089 = vpop.f32.mrb[0].mxu0
        %v1090 = vadd.f32 %v1018, %v1089
        %v1091 = vpop.f32.mrb[0].mxu0
        %v1092 = vpop.f32.mrb[0].mxu0
        %v1093 = vpop.f32.mrb[0].mxu0
        %1094 = vdwg.mxu0
        %1096 = vrot.lane.b32.xlu0 %v1090, 127
        %v1097 = vpop.permute.xlu0 %1096
        %v1099 = vmax.f32 %v1090, %v1097
        %1101 = vrot.lane.b32.xlu0 %v1099, 118
        %v1102 = vpop.permute.xlu0 %1101
        %v1104 = vmax.f32 %v1099, %v1102
        %v1105 = vpack.c.bf16 %v1104, %v1104
        %v1106 = vld [vmem:[%s6] sm:$0xf]
        %v1107 = vld [vmem:[%s6 + $0x4] sm:$0xf]
        %v1108 = vld [vmem:[%s6 + $0x8] sm:$0xf]
        %v1109 = vld [vmem:[%s6 + $0xc] sm:$0xf]
        %v1110 = vld [vmem:[%s6 + $0x10] sm:$0xf]
        %v1111 = vld [vmem:[%s6 + $0x14] sm:$0xf]
        %v1112 = vld [vmem:[%s6 + $0x18] sm:$0xf]
        %v1113 = vld [vmem:[%s6 + $0x1c] sm:$0xf]
        %v1114 = vld [vmem:[%s6 + $0x20] sm:$0x3]
        %v1124 = vunpack.c.l.b16 %v1106
        %v1125 = vunpack.c.l.b16 %v1107
        %v1126 = vunpack.c.l.b16 %v1108
        %v1127 = vunpack.c.l.b16 %v1109
        %v1128 = vunpack.c.l.b16 %v1110
        %v1129 = vunpack.c.l.b16 %v1111
        %v1130 = vunpack.c.l.b16 %v1112
        %v1131 = vunpack.c.l.b16 %v1113
        %v1132 = vunpack.c.l.b16 %v1114
        %v1133 = vpack.c.b16 %v1125, %v1124
        %v1134 = vpack.c.b16 %v1127, %v1126
        %v1135 = vpack.c.b16 %v1129, %v1128
        %v1136 = vpack.c.b16 %v1131, %v1130
        %v1137 = vpack.c.b16 %v1132, %v1132
        %vm1142 = vcmask 547840
        %v1144 = vsel %vm1142, %v1105, 0
        %vm1146 = vcmask 1040384
        %v1147 = vsel %vm1146, 4294967295, 65535
        %v1148 = vsel %vm609, %v1147, 0
        %v1150 = vand.u32 %v1137, %v1148
        %1152 = vmatprep.subr.bf16.mxu0 0
        %1153 = vmatpush1.bf16.msra.mxu0 %v1133
        %1154 = vmatprep.subr.bf16.mxu0 0
        %1155 = vmatpush1.bf16.msra.mxu0 %v1134
        %1156 = vmatprep.subr.bf16.mxu0 0
        %1157 = vmatpush1.bf16.msra.mxu0 %v1135
        %1158 = vmatprep.subr.bf16.mxu0 0
        %1159 = vmatpush1.bf16.msra.mxu0 %v1136
        %1160 = vmatprep.subr.bf16.mxu0 0
        %1161 = vmatpush1.bf16.msra.mxu0 %v1150
        %1162 = vmatprep.subr.bf16.mxu0 0
        %1163 = vmatpush1.bf16.msra.mxu0 0
        %1164 = vmatprep.subr.bf16.mxu0 0
        %1165 = vmatpush1.bf16.msra.mxu0 0
        %1166 = vmatprep.subr.bf16.mxu0 0
        %1167 = vmatpush1.bf16.msra.mxu0 0
        %1168 = vmatprep.subr.bf16.mxu0 0
        %1169 = vmatpush1.bf16.msra.mxu0 0
        %1170 = vmatprep.subr.bf16.mxu0 0
        %1171 = vmatpush1.bf16.msra.mxu0 0
        %1172 = vmatprep.subr.bf16.mxu0 0
        %1173 = vmatpush1.bf16.msra.mxu0 0
        %1174 = vmatprep.subr.bf16.mxu0 0
        %1175 = vmatpush1.bf16.msra.mxu0 0
        %1176 = vmatprep.subr.bf16.mxu0 0
        %1177 = vmatpush1.bf16.msra.mxu0 0
        %1178 = vmatprep.subr.bf16.mxu0 0
        %1179 = vmatpush1.bf16.msra.mxu0 0
        %1180 = vmatprep.subr.bf16.mxu0 0
        %1181 = vmatpush1.bf16.msra.mxu0 0
        %1182 = vmatprep.subr.bf16.mxu0 0
        %1183 = vmatpush1.bf16.msra.mxu0 0
        %1184 = vmatprep.mubr.bf16.mxu0 0
        %1185 = vmatmul.mubr.bf16.gmra.mrb[0].mxu0 %v1144
        %v1186 = vpop.f32.mrb[0].mxu0
        %v1187 = vadd.f32 0.0, %v1186
        %v1188 = vpop.f32.mrb[0].mxu0
        %v1189 = vpop.f32.mrb[0].mxu0
        %v1190 = vpop.f32.mrb[0].mxu0
        %1191 = vdwg.mxu0
        %v1192 = vld [vmem:[%s7] sm:$0xff]
        %v1193 = vmul.f32 %v1187, %v1192
        %v1194 = vrot.slane %v1193, 4
        %v1195 = vadd.f32 %v1193, %v1194
        %v1196 = vrot.slane %v1195, 2
        %v1197 = vadd.f32 %v1195, %v1196
        %v1198 = vrot.slane %v1197, 1
        %v1199 = vadd.f32 %v1197, %v1198
        %v1200 = vmax.f32 %v1199, 0.0
        %v1201 = vpack.c.bf16 %v1200, %v1200
        %v1202 = vld [vmem:[%s8] sm:$0xf]
        %v1203 = vld [vmem:[%s8 + $0x4] sm:$0xf]
        %v1204 = vld [vmem:[%s8 + $0x8] sm:$0xf]
        %v1205 = vld [vmem:[%s8 + $0xc] sm:$0xf]
        %v1206 = vld [vmem:[%s8 + $0x10] sm:$0xf]
        %v1207 = vld [vmem:[%s8 + $0x14] sm:$0xf]
        %v1208 = vld [vmem:[%s8 + $0x18] sm:$0xf]
        %v1209 = vld [vmem:[%s8 + $0x1c] sm:$0xf]
        %v1210 = vld [vmem:[%s8 + $0x20] sm:$0xf]
        %v1211 = vld [vmem:[%s8 + $0x24] sm:$0xf]
        %v1212 = vld [vmem:[%s8 + $0x28] sm:$0xf]
        %v1213 = vld [vmem:[%s8 + $0x2c] sm:$0xf]
        %v1214 = vld [vmem:[%s8 + $0x30] sm:$0xf]
        %v1215 = vld [vmem:[%s8 + $0x34] sm:$0xf]
        %v1216 = vld [vmem:[%s8 + $0x38] sm:$0xf]
        %v1217 = vld [vmem:[%s8 + $0x3c] sm:$0xf]
        %v1218 = vld [vmem:[%s9] sm:$0x1]
        %v1235 = vunpack.c.l.b16 %v1202
        %v1236 = vunpack.c.l.b16 %v1203
        %v1237 = vunpack.c.l.b16 %v1204
        %v1238 = vunpack.c.l.b16 %v1205
        %v1239 = vunpack.c.l.b16 %v1206
        %v1240 = vunpack.c.l.b16 %v1207
        %v1241 = vunpack.c.l.b16 %v1208
        %v1242 = vunpack.c.l.b16 %v1209
        %v1243 = vunpack.c.l.b16 %v1210
        %v1244 = vunpack.c.l.b16 %v1211
        %v1245 = vunpack.c.l.b16 %v1212
        %v1246 = vunpack.c.l.b16 %v1213
        %v1247 = vunpack.c.l.b16 %v1214
        %v1248 = vunpack.c.l.b16 %v1215
        %v1249 = vunpack.c.l.b16 %v1216
        %v1250 = vunpack.c.l.b16 %v1217
        %v1251 = vpack.c.b16 %v1236, %v1235
        %v1252 = vpack.c.b16 %v1238, %v1237
        %v1253 = vpack.c.b16 %v1240, %v1239
        %v1254 = vpack.c.b16 %v1242, %v1241
        %v1255 = vpack.c.b16 %v1244, %v1243
        %v1256 = vpack.c.b16 %v1246, %v1245
        %v1257 = vpack.c.b16 %v1248, %v1247
        %v1258 = vpack.c.b16 %v1250, %v1249
        %1267 = vmatprep.subr.bf16.mxu0 0
        %1268 = vmatpush1.bf16.msra.mxu0 %v1251
        %1269 = vmatprep.subr.bf16.mxu0 0
        %1270 = vmatpush1.bf16.msra.mxu0 %v1252
        %1271 = vmatprep.subr.bf16.mxu0 0
        %1272 = vmatpush1.bf16.msra.mxu0 %v1253
        %1273 = vmatprep.subr.bf16.mxu0 0
        %1274 = vmatpush1.bf16.msra.mxu0 %v1254
        %1275 = vmatprep.subr.bf16.mxu0 0
        %1276 = vmatpush1.bf16.msra.mxu0 %v1255
        %1277 = vmatprep.subr.bf16.mxu0 0
        %1278 = vmatpush1.bf16.msra.mxu0 %v1256
        %1279 = vmatprep.subr.bf16.mxu0 0
        %1280 = vmatpush1.bf16.msra.mxu0 %v1257
        %1281 = vmatprep.subr.bf16.mxu0 0
        %1282 = vmatpush1.bf16.msra.mxu0 %v1258
        %1283 = vmatprep.subr.bf16.mxu0 0
        %1284 = vmatpush1.bf16.msra.mxu0 0
        %1285 = vmatprep.subr.bf16.mxu0 0
        %1286 = vmatpush1.bf16.msra.mxu0 0
        %1287 = vmatprep.subr.bf16.mxu0 0
        %1288 = vmatpush1.bf16.msra.mxu0 0
        %1289 = vmatprep.subr.bf16.mxu0 0
        %1290 = vmatpush1.bf16.msra.mxu0 0
        %1291 = vmatprep.subr.bf16.mxu0 0
        %1292 = vmatpush1.bf16.msra.mxu0 0
        %1293 = vmatprep.subr.bf16.mxu0 0
        %1294 = vmatpush1.bf16.msra.mxu0 0
        %1295 = vmatprep.subr.bf16.mxu0 0
        %1296 = vmatpush1.bf16.msra.mxu0 0
        %1297 = vmatprep.subr.bf16.mxu0 0
        %1298 = vmatpush1.bf16.msra.mxu0 0
        %1299 = vmatprep.mubr.bf16.mxu0 0
        %1300 = vmatmul.mubr.bf16.gmra.mrb[0].mxu0 %v1201
        %v1301 = vpop.f32.mrb[0].mxu0
        %v1302 = vadd.f32 %v1218, %v1301
        %v1303 = vpop.f32.mrb[0].mxu0
        %v1304 = vpop.f32.mrb[0].mxu0
        %v1305 = vpop.f32.mrb[0].mxu0
        %1306 = vdwg.mxu0
        %v1307 = vmax.f32 %v1302, 0.0
        %v1308 = vpack.c.bf16 %v1307, %v1307
        %v1309 = vld [vmem:[%s10] sm:$0xf]
        %v1310 = vld [vmem:[%s10 + $0x4] sm:$0xf]
        %v1311 = vld [vmem:[%s10 + $0x8] sm:$0xf]
        %v1312 = vld [vmem:[%s10 + $0xc] sm:$0xf]
        %v1313 = vld [vmem:[%s11] sm:$0x1]
        %v1318 = vunpack.c.l.b16 %v1309
        %v1319 = vunpack.c.l.b16 %v1310
        %v1320 = vunpack.c.l.b16 %v1311
        %v1321 = vunpack.c.l.b16 %v1312
        %v1322 = vpack.c.b16 %v1319, %v1318
        %v1323 = vpack.c.b16 %v1321, %v1320
        %vm1326 = vcmask 261120
        %v1328 = vsel %vm1326, %v1308, 0
        %1330 = vmatprep.subr.bf16.mxu0 0
        %1331 = vmatpush1.bf16.msra.mxu0 %v1322
        %1332 = vmatprep.subr.bf16.mxu0 0
        %1333 = vmatpush1.bf16.msra.mxu0 %v1323
        %1334 = vmatprep.subr.bf16.mxu0 0
        %1335 = vmatpush1.bf16.msra.mxu0 0
        %1336 = vmatprep.subr.bf16.mxu0 0
        %1337 = vmatpush1.bf16.msra.mxu0 0
        %1338 = vmatprep.subr.bf16.mxu0 0
        %1339 = vmatpush1.bf16.msra.mxu0 0
        %1340 = vmatprep.subr.bf16.mxu0 0
        %1341 = vmatpush1.bf16.msra.mxu0 0
        %1342 = vmatprep.subr.bf16.mxu0 0
        %1343 = vmatpush1.bf16.msra.mxu0 0
        %1344 = vmatprep.subr.bf16.mxu0 0
        %1345 = vmatpush1.bf16.msra.mxu0 0
        %1346 = vmatprep.subr.bf16.mxu0 0
        %1347 = vmatpush1.bf16.msra.mxu0 0
        %1348 = vmatprep.subr.bf16.mxu0 0
        %1349 = vmatpush1.bf16.msra.mxu0 0
        %1350 = vmatprep.subr.bf16.mxu0 0
        %1351 = vmatpush1.bf16.msra.mxu0 0
        %1352 = vmatprep.subr.bf16.mxu0 0
        %1353 = vmatpush1.bf16.msra.mxu0 0
        %1354 = vmatprep.subr.bf16.mxu0 0
        %1355 = vmatpush1.bf16.msra.mxu0 0
        %1356 = vmatprep.subr.bf16.mxu0 0
        %1357 = vmatpush1.bf16.msra.mxu0 0
        %1358 = vmatprep.subr.bf16.mxu0 0
        %1359 = vmatpush1.bf16.msra.mxu0 0
        %1360 = vmatprep.subr.bf16.mxu0 0
        %1361 = vmatpush1.bf16.msra.mxu0 0
        %1362 = vmatprep.mubr.bf16.mxu0 0
        %1363 = vmatmul.mubr.bf16.gmra.mrb[0].mxu0 %v1328
        %v1364 = vpop.f32.mrb[0].mxu0
        %v1365 = vadd.f32 %v1313, %v1364
        %v1366 = vpop.f32.mrb[0].mxu0
        %v1367 = vpop.f32.mrb[0].mxu0
        %v1368 = vpop.f32.mrb[0].mxu0
        %1369 = vdwg.mxu0
        %vm1370 = vcmask 73728
        %1371 = vst.msk [vmem:[%s405] sm:$0x1] %vm1370, %v1365
        %s1372 = sand.u32 %s291, 1
        %s1373 = scalar_lea.sflag [#allocation5], %s1372
        %s1374 = sand.u32 %s291, 1
        %s1375 = scalar_lea.vmem [#allocation4], %s1374
        // Predicated region
        $region69: #{cnn_forward.1} parent=67 // pred_check
          %p1376 = pneg %p301
        $region70: #{cnn_forward.1} parent=67 // pred_check_branch
          %1378 = sbr.rel (%p1376) target = $region72
        $region71: #{cnn_forward.1} parent=67 // pred_region
          %s1380 = ssub.s32 16, 16
          %1381 = vsyncadd %s1373, %s1380
          %s1382 = smul.addr %s26, 16
          %s1383 = scalar_lea.hbm %s12, %s1382
          %s1385 = sshll.u32 %s1375, 4
          %s1386 = int_to_ptr.vmem [resolvable:$true] %s1385
          %1388 = dma.vmem_to_hbm [thread:$0]  %s1386, 16, %s1383, %s1373
        $region72: #{cnn_forward.1} parent=67 // pred_fallthru
          _
      $region68: #{cnn_forward.1} parent=5 // pred_fallthru
        _
      %p1389 = scmp.le.s32.totalorder 2, %s21
      // Predicated region
      $region73: #{cnn_forward.1} parent=5 // pred_check
        %p1390 = pneg %p1389
      $region74: #{cnn_forward.1} parent=5 // pred_check_branch
        %1392 = sbr.rel (%p1390) target = $region76
      $region75: #{cnn_forward.1} parent=5 // pred_region
        %s1393 = ssub.s32 %s21, 2
        // Predicated region
        $region77: #{cnn_forward.1} parent=75 // pred_check
          %p1394 = pneg %p307
        $region78: #{cnn_forward.1} parent=75 // pred_check_branch
          %1396 = sbr.rel (%p1394) target = $region80
        $region79: #{cnn_forward.1} parent=75 // pred_region
          %s1397 = sand.u32 %s292, 1
          %s1398 = scalar_lea.sflag [#allocation5], %s1397
          %s1399 = sand.u32 %s292, 1
          %s1400 = scalar_lea.vmem [#allocation4], %s1399
          %1401 = dma.done %s1398, 16
        $region80: #{cnn_forward.1} parent=75 // pred_fallthru
          _
      $region76: #{cnn_forward.1} parent=5 // pred_fallthru
        _
    $region6: #{cnn_forward.1} parent=1 // loop_footer
      %s25 = sadd.s32 1, %s21
    $region7: #{cnn_forward.1} parent=1 // loop_footer_branch
      %20 = sbr.rel target = $region3
    $region8: #{cnn_forward.1} parent=1 // loop_exit
      _
    %1402 = vsyncpa [#allocation5], 1
    %s1403 = scalar_lea.sflag [#allocation5], 1
    %1404 = vsyncpa %s1403, 1

</llo_original>
